<compile_context>
chip_gen: v6e
topology: v6e:2x2x1
jax: 0.10.0
libtpu: 0.0.40
codegen_flags: <defaults>
</compile_context>

<pallas_src>
import functools

import jax
import jax.numpy as jnp
from jax import lax
from jax.experimental import pallas as pl
from jax.experimental.pallas import tpu as pltpu

_VMEM_LIMIT = 32 * 1024 * 1024           # lifts v5e's 16 MiB scoped default; safe on v6e/v7x
_ENT_RESIDENT_BUDGET = 16 * 1024 * 1024  # budget for the entity-table-resident user kernel


# ---------------------------------------------------------------------------
# small tiling helpers
# ---------------------------------------------------------------------------
def _blk(dim, tile):
    """Pick (block, padded_dim): full-dim block if dim <= tile, else `tile` with padding."""
    if dim <= tile:
        return dim, dim
    pad = ((dim + tile - 1) // tile) * tile
    return tile, pad


def _pad_to(x, rows, cols):
    r, c = x.shape
    if r == rows and c == cols:
        return x
    return jnp.pad(x, ((0, rows - r), (0, cols - c)))


# ---------------------------------------------------------------------------
# row L2-normalize -> bf16 (feeds the cosine-similarity matmul directly)
# ---------------------------------------------------------------------------
def _row_norm_kernel(x_ref, o_ref):
    x = x_ref[...]
    inv = lax.rsqrt(jnp.maximum(jnp.sum(x * x, axis=-1, keepdims=True), 1e-24))
    o_ref[...] = (x * inv).astype(o_ref.dtype)


def row_normalize_bf16(x_padded, bm):
    Mp, D = x_padded.shape
    spec = pl.BlockSpec((bm, D), lambda i: (i, 0))
    return pl.pallas_call(
        _row_norm_kernel,
        out_shape=jax.ShapeDtypeStruct((Mp, D), jnp.bfloat16),
        grid=(Mp // bm,),
        in_specs=[spec],
        out_specs=spec,
        compiler_params=pltpu.CompilerParams(
            dimension_semantics=("parallel",), vmem_limit_bytes=_VMEM_LIMIT),
    )(x_padded)


# ---------------------------------------------------------------------------
# cosine similarity: sim = Xn @ Xn.T  (bf16 operands, f32 MXU accumulation,
# bf16 writeback; single K block since K = channel, padded cols masked to -inf
# so lax.top_k over the padded rows equals top_k over the real columns)
# ---------------------------------------------------------------------------
def _sim_kernel(a_ref, b_ref, o_ref, *, n_valid, bn, mask_cols):
    s = lax.dot_general(a_ref[...], b_ref[...], (((1,), (1,)), ((), ())),
                        preferred_element_type=jnp.float32)
    if mask_cols:
        col = pl.program_id(1) * bn + lax.broadcasted_iota(jnp.int32, s.shape, 1)
        s = jnp.where(col < n_valid, s, -jnp.inf)
    o_ref[...] = s.astype(o_ref.dtype)


def cosine_sim_bf16(xn_padded, *, n_valid, bm):
    Mp, D = xn_padded.shape
    return pl.pallas_call(
        functools.partial(_sim_kernel, n_valid=n_valid, bn=bm, mask_cols=(Mp > n_valid)),
        out_shape=jax.ShapeDtypeStruct((Mp, Mp), jnp.bfloat16),
        grid=(Mp // bm, Mp // bm),
        in_specs=[pl.BlockSpec((bm, D), lambda i, j: (i, 0)),
                  pl.BlockSpec((bm, D), lambda i, j: (j, 0))],
        out_specs=pl.BlockSpec((bm, bm), lambda i, j: (i, j)),
        compiler_params=pltpu.CompilerParams(
            dimension_semantics=("parallel", "parallel"),
            vmem_limit_bytes=_VMEM_LIMIT),
    )(xn_padded, xn_padded)


def build_adj_parts(context, topk, *, tm=512):
    """Returns (padded bf16 sim, per-row top-k threshold, d^{-1/2}, row tile).

    The dense n^2 adjacency is NOT materialized here; it is reconstructed tile-wise
    (mask >= threshold) inside the final fused blend kernel.
    """
    n, D = context.shape
    bm, Mp = _blk(n, tm)
    xn = row_normalize_bf16(_pad_to(context, Mp, D), bm)        # Pallas, eps-guarded
    sim = cosine_sim_bf16(xn, n_valid=n, bm=bm)                 # Pallas, bf16 writeback
    k = min(topk, n)
    knn_val, _ = lax.top_k(sim, k)                              # data-dependent, XLA glue
    knn_val = knn_val.astype(jnp.float32)
    thr = knn_val[:, k - 1:k]                                   # k-th largest per row
    rowsum = jnp.sum(knn_val, axis=1)                           # exact top-k rowsum
    d_inv_sqrt = jnp.where(rowsum > 0.0,
                           lax.rsqrt(jnp.maximum(rowsum, 1e-12)), 0.0)
    return sim, thr, d_inv_sqrt, bm


# ---------------------------------------------------------------------------
# fused item adjacency:
#   item_adj = (1-λ) * D1^{-1/2} A1 D1^{-1/2} + λ * D0^{-1/2} A0 D0^{-1/2}
# where A = sim masked by the per-row top-k threshold (ties at the threshold may
# admit >k entries — minor deviation from the exact scatter).
# ---------------------------------------------------------------------------
def _item_adj_kernel(s1_ref, t1_ref, dr1_ref, dc1_ref,
                     s0_ref, t0_ref, dr0_ref, dc0_ref, o_ref, *, lam):
    s1 = s1_ref[...].astype(jnp.float32)
    new_adj = jnp.where(s1 >= t1_ref[...], s1, 0.0) * dr1_ref[...] * dc1_ref[...]
    s0 = s0_ref[...].astype(jnp.float32)
    old_adj = jnp.where(s0 >= t0_ref[...], s0, 0.0) * dr0_ref[...] * dc0_ref[...]
    o_ref[...] = (1.0 - lam) * new_adj + lam * old_adj


def fused_item_adj(sim1, thr1, d1, sim0, thr0, d0, *, n, bm, lam):
    Mp = sim1.shape[0]
    tile = pl.BlockSpec((bm, bm), lambda i, j: (i, j))
    col = pl.BlockSpec((bm, 1), lambda i, j: (i, 0))
    row = pl.BlockSpec((1, bm), lambda i, j: (0, j))
    out = pl.pallas_call(
        functools.partial(_item_adj_kernel, lam=lam),
        out_shape=jax.ShapeDtypeStruct((Mp, Mp), jnp.float32),
        grid=(Mp // bm, Mp // bm),
        in_specs=[tile, col, col, row, tile, col, col, row],
        out_specs=tile,
        compiler_params=pltpu.CompilerParams(
            dimension_semantics=("parallel", "parallel"),
            vmem_limit_bytes=_VMEM_LIMIT),
    )(sim1, thr1, d1[:, None], d1[None, :], sim0, thr0, d0[:, None], d0[None, :])
    return out[:n, :n]


# ---------------------------------------------------------------------------
# F.normalize + residual add (entity per-hop update), row-gridded
# ---------------------------------------------------------------------------
def _norm_res_kernel(x_ref, res_ref, xn_ref, newres_ref):
    x = x_ref[...]
    inv = lax.rsqrt(jnp.maximum(jnp.sum(x * x, axis=-1, keepdims=True), 1e-24))
    xn = x * inv
    xn_ref[...] = xn
    newres_ref[...] = res_ref[...] + xn


def normalize_residual(x, res, tm=2048):
    M, D = x.shape
    bm, Mp = _blk(M, tm)
    spec = pl.BlockSpec((bm, D), lambda i: (i, 0))
    xn, nr = pl.pallas_call(
        _norm_res_kernel,
        out_shape=(jax.ShapeDtypeStruct((Mp, D), jnp.float32),
                   jax.ShapeDtypeStruct((Mp, D), jnp.float32)),
        grid=(Mp // bm,),
        in_specs=[spec, spec],
        out_specs=(spec, spec),
        compiler_params=pltpu.CompilerParams(
            dimension_semantics=("parallel",), vmem_limit_bytes=_VMEM_LIMIT),
    )(_pad_to(x, Mp, D), _pad_to(res, Mp, D))
    return xn[:M], nr[:M]


# ---------------------------------------------------------------------------
# edge attention: neigh_rel = tail*rel ; att = ||head*rel||^2 * ||tail*rel||^2
# ---------------------------------------------------------------------------
def _edge_att_kernel(eh_ref, et_ref, rel_ref, nre_ref, att_ref):
    eh = eh_ref[...]
    et = et_ref[...]
    rel = rel_ref[...]
    tr = et * rel
    hr = eh * rel
    nre_ref[...] = tr
    # (E,1) att output uses masked stores; tiny vs. the (E,D) streams.
    att_ref[...] = (jnp.sum(hr * hr, axis=-1, keepdims=True)
                    * jnp.sum(tr * tr, axis=-1, keepdims=True))


def edge_attention(e_head, e_tail, rel, te=4096):
    E, D = e_head.shape
    be, Ep = _blk(E, te)
    row_spec = pl.BlockSpec((be, D), lambda i: (i, 0))
    nre, att = pl.pallas_call(
        _edge_att_kernel,
        out_shape=(jax.ShapeDtypeStruct((Ep, D), jnp.float32),
                   jax.ShapeDtypeStruct((Ep, 1), jnp.float32)),
        grid=(Ep // be,),
        in_specs=[row_spec, row_spec, row_spec],
        out_specs=(row_spec, pl.BlockSpec((be, 1), lambda i: (i, 0))),
        compiler_params=pltpu.CompilerParams(
            dimension_semantics=("parallel",), vmem_limit_bytes=_VMEM_LIMIT),
    )(_pad_to(e_head, Ep, D), _pad_to(e_tail, Ep, D), _pad_to(rel, Ep, D))
    return nre[:E], att[:E, 0]


# ---------------------------------------------------------------------------
# fused user path:
#   user_agg0 = interact_mat @ entity_emb      (int8 stream, in-kernel bf16 upcast, MXU)
#   score     = softmax(user_emb @ W.T)
#   user_agg  = user_agg0 + (score @ W) * user_agg0
#   user_emb' = F.normalize(user_agg); user_res' = user_res + user_emb'
# ---------------------------------------------------------------------------
def _user_epilogue(agg, user_ref, w_ref, res_ref, uemb_ref, ures_ref):
    user = user_ref[...]
    w = w_ref[...]
    score = lax.dot_general(user, w, (((1,), (1,)), ((), ())),
                            preferred_element_type=jnp.float32)
    score = jax.nn.softmax(score, axis=-1)
    ua = agg + jnp.dot(score, w, preferred_element_type=jnp.float32) * agg
    inv = lax.rsqrt(jnp.maximum(jnp.sum(ua * ua, axis=-1, keepdims=True), 1e-24))
    un = ua * inv
    uemb_ref[...] = un
    ures_ref[...] = res_ref[...] + un


def _user_fused_single_kernel(im_ref, ent_ref, user_ref, w_ref, res_ref,
                              uemb_ref, ures_ref):
    # int8 0/1 tile -> bf16 (via f32, cheap VPU work under the MXU); bf16 MXU, f32 accum.
    im = im_ref[...].astype(jnp.float32).astype(jnp.bfloat16)
    agg = jnp.dot(im, ent_ref[...], preferred_element_type=jnp.float32)
    _user_epilogue(agg, user_ref, w_ref, res_ref, uemb_ref, ures_ref)


def _user_fused_kblock_kernel(im_ref, ent_ref, user_ref, w_ref, res_ref,
                              uemb_ref, ures_ref, acc_ref):
    k = pl.program_id(1)

    @pl.when(k == 0)
    def _():
        acc_ref[...] = jnp.zeros_like(acc_ref)

    im = im_ref[...].astype(jnp.float32).astype(jnp.bfloat16)
    acc_ref[...] += jnp.dot(im, ent_ref[...], preferred_element_type=jnp.float32)

    @pl.when(k == pl.num_programs(1) - 1)
    def _():
        _user_epilogue(acc_ref[...], user_ref, w_ref, res_ref, uemb_ref, ures_ref)


def user_aggregate_fused(im_p, entity_emb, user_emb, weight, user_res,
                         *, n_users, bm, Mp, bk, Kp):
    D = entity_emb.shape[1]
    R = weight.shape[0]
    ent = _pad_to(entity_emb, Kp, D).astype(jnp.bfloat16)   # changes each hop (small)
    ue = _pad_to(user_emb, Mp, D)
    ur = _pad_to(user_res, Mp, D)

    out_shape = (jax.ShapeDtypeStruct((Mp, D), jnp.float32),
                 jax.ShapeDtypeStruct((Mp, D), jnp.float32))

    if Kp == bk:
        # Entity table fully VMEM-resident: single K step, no accumulator round-trip.
        row = pl.BlockSpec((bm, D), lambda i: (i, 0))
        uemb, ures = pl.pallas_call(
            _user_fused_single_kernel,
            out_shape=out_shape,
            grid=(Mp // bm,),
            in_specs=[pl.BlockSpec((bm, Kp), lambda i: (i, 0)),
                      pl.BlockSpec((Kp, D), lambda i: (0, 0)),
                      row,
                      pl.BlockSpec((R, D), lambda i: (0, 0)),
                      row],
            out_specs=(row, row),
            compiler_params=pltpu.CompilerParams(
                dimension_semantics=("parallel",), vmem_limit_bytes=_VMEM_LIMIT),
        )(im_p, ent, ue, weight, ur)
    else:
        # K-blocked accumulate: safe for large entity counts / v7x's 64 MiB VMEM.
        row = pl.BlockSpec((bm, D), lambda i, k: (i, 0))
        uemb, ures = pl.pallas_call(
            _user_fused_kblock_kernel,
            out_shape=out_shape,
            grid=(Mp // bm, Kp // bk),
            in_specs=[pl.BlockSpec((bm, bk), lambda i, k: (i, k)),
                      pl.BlockSpec((bk, D), lambda i, k: (k, 0)),
                      row,
                      pl.BlockSpec((R, D), lambda i, k: (0, 0)),
                      row],
            out_specs=(row, row),
            scratch_shapes=[pltpu.VMEM((bm, D), jnp.float32)],
            compiler_params=pltpu.CompilerParams(
                dimension_semantics=("parallel", "arbitrary"),
                vmem_limit_bytes=_VMEM_LIMIT),
        )(im_p, ent, ue, weight, ur)
    return uemb[:n_users], ures[:n_users]


# ---------------------------------------------------------------------------
# JAX glue reproducing the PyTorch module structure
# ---------------------------------------------------------------------------
def aggregator(entity_emb, user_emb, edge_index, edge_type, im_p, weight, user_res_emb,
               *, n_users, n_entities, bm_u, Mp_u, bk_u, Kp_u):
    head, tail = edge_index[0], edge_index[1]

    # TODO(synk): row gathers stay in the XLA wrapper; a scalar-prefetch DMA-gather
    # Pallas variant could overlap them with the edge-attention compute.
    rel = weight[edge_type - 1]
    e_head = entity_emb[head]
    e_tail = entity_emb[tail]

    neigh_rel_emb, att = edge_attention(e_head, e_tail, rel)     # Pallas, edge-block grid

    # scatter_softmax over 'head' segments (data-dependent scatter, JAX glue)
    seg_max = jax.ops.segment_max(att, head, num_segments=n_entities)
    ex = jnp.exp(att - seg_max[head])
    seg_sum = jax.ops.segment_sum(ex, head, num_segments=n_entities)
    w_soft = ex / seg_sum[head]

    # scatter_sum as a true O(E*D) segment sum
    entity_agg = jax.ops.segment_sum(neigh_rel_emb * w_soft[:, None], head,
                                     num_segments=n_entities)

    # fused: sparse.mm + softmax-gated update + F.normalize + residual (one pallas_call)
    user_emb_new, user_res_new = user_aggregate_fused(
        im_p, entity_emb, user_emb, weight, user_res_emb,
        n_users=n_users, bm=bm_u, Mp=Mp_u, bk=bk_u, Kp=Kp_u)
    return entity_agg, user_emb_new, user_res_new


def graph_conv_forward(user_emb, entity_emb, edge_index, edge_type, interact_mat,
                       weight, n_hops=2, topk=10, lambda_coeff=0.5):
    # TODO(synk): mess_dropout / node_dropout are stochastic; executed as identity (eval mode).
    n_users, D = user_emb.shape
    n_entities = entity_emb.shape[0]

    # ---- interact_mat: pad + cast ONCE (hoisted out of the hop loop), streamed at 1 B/elem.
    # TODO(synk): int8 storage assumes a binary (0/1) interaction matrix; keep bf16 if it
    # carries normalized weights, and use fp8 on v7x for a native 1-byte MXU path.
    bm_u, Mp_u = _blk(n_users, 256)
    resident_bytes = 2 * bm_u * n_entities + 4 * n_entities * D   # im tile (x2) + ent bf16 (x2)
    if resident_bytes <= _ENT_RESIDENT_BUDGET:
        bk_u, Kp_u = _blk(n_entities, n_entities)   # whole entity table resident in VMEM
    else:
        bk_u, Kp_u = _blk(n_entities, 2048)         # K-blocked accumulate (v7x-safe)
    im_p = _pad_to(interact_mat, Mp_u, Kp_u).astype(jnp.int8)

    # ---- original item adjacency: keep only (sim, threshold, d^{-1/2}); defer the dense
    #      n^2 materialization of L_origin to the final fused blend kernel.
    sim0, thr0, d0, bm_a = build_adj_parts(entity_emb, topk)

    entity_res_emb = entity_emb
    user_res_emb = user_emb
    for _ in range(n_hops):
        entity_agg, user_emb, user_res_emb = aggregator(
            entity_emb, user_emb, edge_index, edge_type, im_p, weight, user_res_emb,
            n_users=n_users, n_entities=n_entities,
            bm_u=bm_u, Mp_u=Mp_u, bk_u=bk_u, Kp_u=Kp_u)
        entity_emb, entity_res_emb = normalize_residual(entity_agg, entity_res_emb)

    sim1, thr1, d1, _ = build_adj_parts(entity_res_emb, topk)
    # new-adjacency D-scaling, top-k thresholding and the (1-λ)·new + λ·origin blend
    # all fused into a single tiled n^2 pass.
    item_adj = fused_item_adj(sim1, thr1, d1, sim0, thr0, d0,
                              n=n_entities, bm=bm_a, lam=lambda_coeff)
    return entity_res_emb, user_res_emb, item_adj


# ---------------------------------------------------------------------------
if __name__ == "__main__":
    n_users, n_entities, channel = 8, 32, 16
    n_relations, n_edges, n_hops, topk = 5, 64, 2, 10

    key = jax.random.PRNGKey(0)
    ks = jax.random.split(key, 7)
    user_emb = jax.random.normal(ks[0], (n_users, channel), jnp.float32)
    entity_emb = jax.random.normal(ks[1], (n_entities, channel), jnp.float32)
    head = jax.random.randint(ks[2], (n_edges,), 0, n_entities, jnp.int32)
    tail = jax.random.randint(ks[3], (n_edges,), 0, n_entities, jnp.int32)
    edge_index = jnp.stack([head, tail])                          # [2, n_edges]
    edge_type = jax.random.randint(ks[4], (n_edges,), 1, n_relations, jnp.int32)
    interact_mat = (jax.random.uniform(ks[5], (n_users, n_entities)) < 0.3).astype(jnp.float32)

    # nn.init.xavier_uniform_ on weight of shape [n_relations - 1, channel]
    bound = (6.0 / (channel + (n_relations - 1))) ** 0.5
    weight = jax.random.uniform(ks[6], (n_relations - 1, channel), jnp.float32,
                                minval=-bound, maxval=bound)

    forward = jax.jit(functools.partial(graph_conv_forward,
                                        n_hops=n_hops, topk=topk, lambda_coeff=0.5))
    entity_res_emb, user_res_emb, item_adj = forward(
        user_emb, entity_emb, edge_index, edge_type, interact_mat, weight)

    jax.block_until_ready((entity_res_emb, user_res_emb, item_adj))
    print("KERNEL_OK")
</pallas_src>

<mosaic_0001>
module attributes {stable_mosaic.version = 11 : i64} {
  func.func private @main(%arg0: i32) attributes {dimension_semantics = [#tpu.dimension_semantics<core_parallel>], iteration_bounds = array<i64: 2>, tpu.core_type = #tpu.core_type<sc_scalar_subcore>, window_params = []} {
    return
  }
}

module attributes {stable_mosaic.version = 11 : i64} {
  func.func private @main(%arg0: i32) attributes {dimension_semantics = [#tpu.dimension_semantics<core_parallel>], iteration_bounds = array<i64: 2>, tpu.core_type = #tpu.core_type<sc_scalar_subcore>, window_params = []} {
    return
  }
}

module attributes {stable_mosaic.version = 11 : i64} {
  func.func @_row_norm_kernel(%arg0: i32, %arg1: memref<32x16xf32, #tpu.memory_space<vmem>>, %arg2: memref<32x16xbf16, #tpu.memory_space<vmem>>) attributes {dimension_semantics = [#tpu.dimension_semantics<parallel>], iteration_bounds = array<i64: 1>, scalar_prefetch = 0 : i64, scratch_operands = 0 : i64, tpu.core_type = #tpu.core_type<tc>, window_params = [{transform_indices = @transform_0, window_bounds = array<i64: 32, 16>}, {transform_indices = @transform_1, window_bounds = array<i64: 32, 16>}]} {
    %c0 = arith.constant 0 : index
    %c0_0 = arith.constant 0 : index
    %0 = vector.load %arg1[%c0, %c0_0] : memref<32x16xf32, #tpu.memory_space<vmem>>, vector<32x16xf32>
    %1 = arith.mulf %0, %0 : vector<32x16xf32>
    %cst = arith.constant dense<0.000000e+00> : vector<32xf32>
    %2 = vector.multi_reduction <add>, %1, %cst [1] : vector<32x16xf32> to vector<32xf32>
    %3 = vector.shape_cast %2 : vector<32xf32> to vector<32x1xf32>
    %cst_1 = arith.constant 1.000000e-24 : f32
    %4 = vector.broadcast %cst_1 : f32 to vector<32x1xf32>
    %5 = arith.maximumf %3, %4 : vector<32x1xf32>
    %6 = math.rsqrt %5 : vector<32x1xf32>
    %7 = vector.broadcast %6 : vector<32x1xf32> to vector<32x16xf32>
    %8 = arith.mulf %0, %7 : vector<32x16xf32>
    %9 = arith.truncf %8 : vector<32x16xf32> to vector<32x16xbf16>
    %c0_2 = arith.constant 0 : index
    %c0_3 = arith.constant 0 : index
    %10 = vector.load %arg2[%c0_2, %c0_3] : memref<32x16xbf16, #tpu.memory_space<vmem>>, vector<32x16xbf16>
    tpu.vector_store %arg2[%c0_2, %c0_3], %9 {strides = array<i32>} : memref<32x16xbf16, #tpu.memory_space<vmem>>, vector<32x16xbf16>,
    return
  }
  func.func @transform_0(%arg0: i32) -> (i32, i32) {
    %c0_i32 = arith.constant 0 : i32
    %c0_i32_0 = arith.constant 0 : i32
    return %arg0, %c0_i32 : i32, i32
  }
  func.func @transform_1(%arg0: i32) -> (i32, i32) {
    %c0_i32 = arith.constant 0 : i32
    %c0_i32_0 = arith.constant 0 : i32
    return %arg0, %c0_i32 : i32, i32
  }
}

module attributes {stable_mosaic.version = 11 : i64} {
  func.func @_sim_kernel(%arg0: i32, %arg1: i32, %arg2: memref<32x16xbf16, #tpu.memory_space<vmem>>, %arg3: memref<32x16xbf16, #tpu.memory_space<vmem>>, %arg4: memref<32x32xbf16, #tpu.memory_space<vmem>>) attributes {dimension_semantics = [#tpu.dimension_semantics<parallel>, #tpu.dimension_semantics<parallel>], iteration_bounds = array<i64: 1, 1>, scalar_prefetch = 0 : i64, scratch_operands = 0 : i64, tpu.core_type = #tpu.core_type<tc>, window_params = [{transform_indices = @transform_0, window_bounds = array<i64: 32, 16>}, {transform_indices = @transform_1, window_bounds = array<i64: 32, 16>}, {transform_indices = @transform_2, window_bounds = array<i64: 32, 32>}]} {
    %c0 = arith.constant 0 : index
    %c0_0 = arith.constant 0 : index
    %0 = vector.load %arg2[%c0, %c0_0] : memref<32x16xbf16, #tpu.memory_space<vmem>>, vector<32x16xbf16>
    %c0_1 = arith.constant 0 : index
    %c0_2 = arith.constant 0 : index
    %1 = vector.load %arg3[%c0_1, %c0_2] : memref<32x16xbf16, #tpu.memory_space<vmem>>, vector<32x16xbf16>
    %cst = arith.constant dense<0.000000e+00> : vector<32x32xf32>
    %2 = tpu.matmul %0, %1, %cst {dimension_numbers = #tpu.dot_dimension_numbers<[1], [1], [0], [0], [0, 0, 1, 0], [], []>} : vector<32x16xbf16>, vector<32x16xbf16>, vector<32x32xf32> -> vector<32x32xf32>
    %3 = arith.truncf %2 : vector<32x32xf32> to vector<32x32xbf16>
    %c0_3 = arith.constant 0 : index
    %c0_4 = arith.constant 0 : index
    %4 = vector.load %arg4[%c0_3, %c0_4] : memref<32x32xbf16, #tpu.memory_space<vmem>>, vector<32x32xbf16>
    tpu.vector_store %arg4[%c0_3, %c0_4], %3 {strides = array<i32>} : memref<32x32xbf16, #tpu.memory_space<vmem>>, vector<32x32xbf16>,
    return
  }
  func.func @transform_0(%arg0: i32, %arg1: i32) -> (i32, i32) {
    %c0_i32 = arith.constant 0 : i32
    %c0_i32_0 = arith.constant 0 : i32
    return %arg0, %c0_i32 : i32, i32
  }
  func.func @transform_1(%arg0: i32, %arg1: i32) -> (i32, i32) {
    %c0_i32 = arith.constant 0 : i32
    %c0_i32_0 = arith.constant 0 : i32
    return %arg1, %c0_i32 : i32, i32
  }
  func.func @transform_2(%arg0: i32, %arg1: i32) -> (i32, i32) {
    %c0_i32 = arith.constant 0 : i32
    return %arg0, %arg1 : i32, i32
  }
}

module attributes {stable_mosaic.version = 11 : i64} {
  func.func @_edge_att_kernel(%arg0: i32, %arg1: memref<64x16xf32, #tpu.memory_space<vmem>>, %arg2: memref<64x16xf32, #tpu.memory_space<vmem>>, %arg3: memref<64x16xf32, #tpu.memory_space<vmem>>, %arg4: memref<64x16xf32, #tpu.memory_space<vmem>>, %arg5: memref<64x1xf32, #tpu.memory_space<vmem>>) attributes {dimension_semantics = [#tpu.dimension_semantics<parallel>], iteration_bounds = array<i64: 1>, scalar_prefetch = 0 : i64, scratch_operands = 0 : i64, tpu.core_type = #tpu.core_type<tc>, window_params = [{transform_indices = @transform_0, window_bounds = array<i64: 64, 16>}, {transform_indices = @transform_1, window_bounds = array<i64: 64, 16>}, {transform_indices = @transform_2, window_bounds = array<i64: 64, 16>}, {transform_indices = @transform_3, window_bounds = array<i64: 64, 16>}, {transform_indices = @transform_4, window_bounds = array<i64: 64, 1>}]} {
    %c0 = arith.constant 0 : index
    %c0_0 = arith.constant 0 : index
    %0 = vector.load %arg1[%c0, %c0_0] : memref<64x16xf32, #tpu.memory_space<vmem>>, vector<64x16xf32>
    %c0_1 = arith.constant 0 : index
    %c0_2 = arith.constant 0 : index
    %1 = vector.load %arg2[%c0_1, %c0_2] : memref<64x16xf32, #tpu.memory_space<vmem>>, vector<64x16xf32>
    %c0_3 = arith.constant 0 : index
    %c0_4 = arith.constant 0 : index
    %2 = vector.load %arg3[%c0_3, %c0_4] : memref<64x16xf32, #tpu.memory_space<vmem>>, vector<64x16xf32>
    %3 = arith.mulf %1, %2 : vector<64x16xf32>
    %4 = arith.mulf %0, %2 : vector<64x16xf32>
    %c0_5 = arith.constant 0 : index
    %c0_6 = arith.constant 0 : index
    %5 = vector.load %arg4[%c0_5, %c0_6] : memref<64x16xf32, #tpu.memory_space<vmem>>, vector<64x16xf32>
    tpu.vector_store %arg4[%c0_5, %c0_6], %3 {strides = array<i32>} : memref<64x16xf32, #tpu.memory_space<vmem>>, vector<64x16xf32>,
    %6 = arith.mulf %4, %4 : vector<64x16xf32>
    %cst = arith.constant dense<0.000000e+00> : vector<64xf32>
    %7 = vector.multi_reduction <add>, %6, %cst [1] : vector<64x16xf32> to vector<64xf32>
    %8 = vector.shape_cast %7 : vector<64xf32> to vector<64x1xf32>
    %9 = arith.mulf %3, %3 : vector<64x16xf32>
    %cst_7 = arith.constant dense<0.000000e+00> : vector<64xf32>
    %10 = vector.multi_reduction <add>, %9, %cst_7 [1] : vector<64x16xf32> to vector<64xf32>
    %11 = vector.shape_cast %10 : vector<64xf32> to vector<64x1xf32>
    %12 = arith.mulf %8, %11 : vector<64x1xf32>
    %c0_8 = arith.constant 0 : index
    %c0_9 = arith.constant 0 : index
    %13 = vector.load %arg5[%c0_8, %c0_9] : memref<64x1xf32, #tpu.memory_space<vmem>>, vector<64x1xf32>
    tpu.vector_store %arg5[%c0_8, %c0_9], %12 {strides = array<i32>} : memref<64x1xf32, #tpu.memory_space<vmem>>, vector<64x1xf32>,
    return
  }
  func.func @transform_0(%arg0: i32) -> (i32, i32) {
    %c0_i32 = arith.constant 0 : i32
    %c0_i32_0 = arith.constant 0 : i32
    return %arg0, %c0_i32 : i32, i32
  }
  func.func @transform_1(%arg0: i32) -> (i32, i32) {
    %c0_i32 = arith.constant 0 : i32
    %c0_i32_0 = arith.constant 0 : i32
    return %arg0, %c0_i32 : i32, i32
  }
  func.func @transform_2(%arg0: i32) -> (i32, i32) {
    %c0_i32 = arith.constant 0 : i32
    %c0_i32_0 = arith.constant 0 : i32
    return %arg0, %c0_i32 : i32, i32
  }
  func.func @transform_3(%arg0: i32) -> (i32, i32) {
    %c0_i32 = arith.constant 0 : i32
    %c0_i32_0 = arith.constant 0 : i32
    return %arg0, %c0_i32 : i32, i32
  }
  func.func @transform_4(%arg0: i32) -> (i32, i32) {
    %c0_i32 = arith.constant 0 : i32
    %c0_i32_0 = arith.constant 0 : i32
    return %arg0, %c0_i32 : i32, i32
  }
}

module attributes {stable_mosaic.version = 11 : i64} {
  func.func @_user_fused_single_kernel(%arg0: i32, %arg1: memref<8x32xi8, #tpu.memory_space<vmem>>, %arg2: memref<32x16xbf16, #tpu.memory_space<vmem>>, %arg3: memref<8x16xf32, #tpu.memory_space<vmem>>, %arg4: memref<4x16xf32, #tpu.memory_space<vmem>>, %arg5: memref<8x16xf32, #tpu.memory_space<vmem>>, %arg6: memref<8x16xf32, #tpu.memory_space<vmem>>, %arg7: memref<8x16xf32, #tpu.memory_space<vmem>>) attributes {dimension_semantics = [#tpu.dimension_semantics<parallel>], iteration_bounds = array<i64: 1>, scalar_prefetch = 0 : i64, scratch_operands = 0 : i64, tpu.core_type = #tpu.core_type<tc>, window_params = [{transform_indices = @transform_0, window_bounds = array<i64: 8, 32>}, {pipeline_mode = #tpu.pipeline_mode<synchronous>, transform_indices = @transform_1, window_bounds = array<i64: 32, 16>}, {transform_indices = @transform_2, window_bounds = array<i64: 8, 16>}, {pipeline_mode = #tpu.pipeline_mode<synchronous>, transform_indices = @transform_3, window_bounds = array<i64: 4, 16>}, {transform_indices = @transform_4, window_bounds = array<i64: 8, 16>}, {transform_indices = @transform_5, window_bounds = array<i64: 8, 16>}, {transform_indices = @transform_6, window_bounds = array<i64: 8, 16>}]} {
    %c0 = arith.constant 0 : index
    %c0_0 = arith.constant 0 : index
    %0 = vector.load %arg1[%c0, %c0_0] : memref<8x32xi8, #tpu.memory_space<vmem>>, vector<8x32xi8>
    %1 = arith.sitofp %0 : vector<8x32xi8> to vector<8x32xf32>
    %2 = arith.truncf %1 : vector<8x32xf32> to vector<8x32xbf16>
    %c0_1 = arith.constant 0 : index
    %c0_2 = arith.constant 0 : index
    %3 = vector.load %arg2[%c0_1, %c0_2] : memref<32x16xbf16, #tpu.memory_space<vmem>>, vector<32x16xbf16>
    %cst = arith.constant dense<0.000000e+00> : vector<8x16xf32>
    %4 = tpu.matmul %2, %3, %cst {dimension_numbers = #tpu.dot_dimension_numbers<[1], [0], [0], [1], [0, 0, 1, 1], [], []>} : vector<8x32xbf16>, vector<32x16xbf16>, vector<8x16xf32> -> vector<8x16xf32>
    %c0_3 = arith.constant 0 : index
    %c0_4 = arith.constant 0 : index
    %5 = vector.load %arg3[%c0_3, %c0_4] : memref<8x16xf32, #tpu.memory_space<vmem>>, vector<8x16xf32>
    %c0_5 = arith.constant 0 : index
    %c0_6 = arith.constant 0 : index
    %6 = vector.load %arg4[%c0_5, %c0_6] : memref<4x16xf32, #tpu.memory_space<vmem>>, vector<4x16xf32>
    %cst_7 = arith.constant dense<0.000000e+00> : vector<8x4xf32>
    %7 = tpu.matmul %5, %6, %cst_7 {dimension_numbers = #tpu.dot_dimension_numbers<[1], [1], [0], [0], [0, 0, 1, 0], [], []>} : vector<8x16xf32>, vector<4x16xf32>, vector<8x4xf32> -> vector<8x4xf32>
    %cst_8 = arith.constant dense<0xFF800000> : vector<8xf32>
    %8 = vector.multi_reduction <maximumf>, %7, %cst_8 [1] : vector<8x4xf32> to vector<8xf32>
    %cst_9 = arith.constant 0xFF800000 : f32
    %9 = vector.broadcast %cst_9 : f32 to vector<8xf32>
    %10 = arith.maximumf %9, %8 : vector<8xf32>
    %11 = vector.shape_cast %10 : vector<8xf32> to vector<8x1xf32>
    %12 = vector.broadcast %11 : vector<8x1xf32> to vector<8x4xf32>
    %13 = arith.subf %7, %12 : vector<8x4xf32>
    %14 = math.exp %13 : vector<8x4xf32>
    %cst_10 = arith.constant dense<0.000000e+00> : vector<8xf32>
    %15 = vector.multi_reduction <add>, %14, %cst_10 [1] : vector<8x4xf32> to vector<8xf32>
    %16 = vector.shape_cast %15 : vector<8xf32> to vector<8x1xf32>
    %17 = vector.broadcast %16 : vector<8x1xf32> to vector<8x4xf32>
    %18 = arith.divf %14, %17 : vector<8x4xf32>
    %cst_11 = arith.constant dense<0.000000e+00> : vector<8x16xf32>
    %19 = tpu.matmul %18, %6, %cst_11 {dimension_numbers = #tpu.dot_dimension_numbers<[1], [0], [0], [1], [0, 0, 1, 1], [], []>} : vector<8x4xf32>, vector<4x16xf32>, vector<8x16xf32> -> vector<8x16xf32>
    %20 = arith.mulf %19, %4 : vector<8x16xf32>
    %21 = arith.addf %4, %20 : vector<8x16xf32>
    %22 = arith.mulf %21, %21 : vector<8x16xf32>
    %cst_12 = arith.constant dense<0.000000e+00> : vector<8xf32>
    %23 = vector.multi_reduction <add>, %22, %cst_12 [1] : vector<8x16xf32> to vector<8xf32>
    %24 = vector.shape_cast %23 : vector<8xf32> to vector<8x1xf32>
    %cst_13 = arith.constant 1.000000e-24 : f32
    %25 = vector.broadcast %cst_13 : f32 to vector<8x1xf32>
    %26 = arith.maximumf %24, %25 : vector<8x1xf32>
    %27 = math.rsqrt %26 : vector<8x1xf32>
    %28 = vector.broadcast %27 : vector<8x1xf32> to vector<8x16xf32>
    %29 = arith.mulf %21, %28 : vector<8x16xf32>
    %c0_14 = arith.constant 0 : index
    %c0_15 = arith.constant 0 : index
    %30 = vector.load %arg6[%c0_14, %c0_15] : memref<8x16xf32, #tpu.memory_space<vmem>>, vector<8x16xf32>
    tpu.vector_store %arg6[%c0_14, %c0_15], %29 {strides = array<i32>} : memref<8x16xf32, #tpu.memory_space<vmem>>, vector<8x16xf32>,
    %c0_16 = arith.constant 0 : index
    %c0_17 = arith.constant 0 : index
    %31 = vector.load %arg5[%c0_16, %c0_17] : memref<8x16xf32, #tpu.memory_space<vmem>>, vector<8x16xf32>
    %32 = arith.addf %31, %29 : vector<8x16xf32>
    %c0_18 = arith.constant 0 : index
    %c0_19 = arith.constant 0 : index
    %33 = vector.load %arg7[%c0_18, %c0_19] : memref<8x16xf32, #tpu.memory_space<vmem>>, vector<8x16xf32>
    tpu.vector_store %arg7[%c0_18, %c0_19], %32 {strides = array<i32>} : memref<8x16xf32, #tpu.memory_space<vmem>>, vector<8x16xf32>,
    return
  }
  func.func @transform_0(%arg0: i32) -> (i32, i32) {
    %c0_i32 = arith.constant 0 : i32
    %c0_i32_0 = arith.constant 0 : i32
    return %arg0, %c0_i32 : i32, i32
  }
  func.func @transform_1(%arg0: i32) -> (i32, i32) {
    %c0_i32 = arith.constant 0 : i32
    %c0_i32_0 = arith.constant 0 : i32
    %c0_i32_1 = arith.constant 0 : i32
    return %c0_i32, %c0_i32_0 : i32, i32
  }
  func.func @transform_2(%arg0: i32) -> (i32, i32) {
    %c0_i32 = arith.constant 0 : i32
    %c0_i32_0 = arith.constant 0 : i32
    return %arg0, %c0_i32 : i32, i32
  }
  func.func @transform_3(%arg0: i32) -> (i32, i32) {
    %c0_i32 = arith.constant 0 : i32
    %c0_i32_0 = arith.constant 0 : i32
    %c0_i32_1 = arith.constant 0 : i32
    return %c0_i32, %c0_i32_0 : i32, i32
  }
  func.func @transform_4(%arg0: i32) -> (i32, i32) {
    %c0_i32 = arith.constant 0 : i32
    %c0_i32_0 = arith.constant 0 : i32
    return %arg0, %c0_i32 : i32, i32
  }
  func.func @transform_5(%arg0: i32) -> (i32, i32) {
    %c0_i32 = arith.constant 0 : i32
    %c0_i32_0 = arith.constant 0 : i32
    return %arg0, %c0_i32 : i32, i32
  }
  func.func @transform_6(%arg0: i32) -> (i32, i32) {
    %c0_i32 = arith.constant 0 : i32
    %c0_i32_0 = arith.constant 0 : i32
    return %arg0, %c0_i32 : i32, i32
  }
}

module attributes {stable_mosaic.version = 11 : i64} {
  func.func @_norm_res_kernel(%arg0: i32, %arg1: memref<32x16xf32, #tpu.memory_space<vmem>>, %arg2: memref<32x16xf32, #tpu.memory_space<vmem>>, %arg3: memref<32x16xf32, #tpu.memory_space<vmem>>, %arg4: memref<32x16xf32, #tpu.memory_space<vmem>>) attributes {dimension_semantics = [#tpu.dimension_semantics<parallel>], iteration_bounds = array<i64: 1>, scalar_prefetch = 0 : i64, scratch_operands = 0 : i64, tpu.core_type = #tpu.core_type<tc>, window_params = [{transform_indices = @transform_0, window_bounds = array<i64: 32, 16>}, {transform_indices = @transform_1, window_bounds = array<i64: 32, 16>}, {transform_indices = @transform_2, window_bounds = array<i64: 32, 16>}, {transform_indices = @transform_3, window_bounds = array<i64: 32, 16>}]} {
    %c0 = arith.constant 0 : index
    %c0_0 = arith.constant 0 : index
    %0 = vector.load %arg1[%c0, %c0_0] : memref<32x16xf32, #tpu.memory_space<vmem>>, vector<32x16xf32>
    %1 = arith.mulf %0, %0 : vector<32x16xf32>
    %cst = arith.constant dense<0.000000e+00> : vector<32xf32>
    %2 = vector.multi_reduction <add>, %1, %cst [1] : vector<32x16xf32> to vector<32xf32>
    %3 = vector.shape_cast %2 : vector<32xf32> to vector<32x1xf32>
    %cst_1 = arith.constant 1.000000e-24 : f32
    %4 = vector.broadcast %cst_1 : f32 to vector<32x1xf32>
    %5 = arith.maximumf %3, %4 : vector<32x1xf32>
    %6 = math.rsqrt %5 : vector<32x1xf32>
    %7 = vector.broadcast %6 : vector<32x1xf32> to vector<32x16xf32>
    %8 = arith.mulf %0, %7 : vector<32x16xf32>
    %c0_2 = arith.constant 0 : index
    %c0_3 = arith.constant 0 : index
    %9 = vector.load %arg3[%c0_2, %c0_3] : memref<32x16xf32, #tpu.memory_space<vmem>>, vector<32x16xf32>
    tpu.vector_store %arg3[%c0_2, %c0_3], %8 {strides = array<i32>} : memref<32x16xf32, #tpu.memory_space<vmem>>, vector<32x16xf32>,
    %c0_4 = arith.constant 0 : index
    %c0_5 = arith.constant 0 : index
    %10 = vector.load %arg2[%c0_4, %c0_5] : memref<32x16xf32, #tpu.memory_space<vmem>>, vector<32x16xf32>
    %11 = arith.addf %10, %8 : vector<32x16xf32>
    %c0_6 = arith.constant 0 : index
    %c0_7 = arith.constant 0 : index
    %12 = vector.load %arg4[%c0_6, %c0_7] : memref<32x16xf32, #tpu.memory_space<vmem>>, vector<32x16xf32>
    tpu.vector_store %arg4[%c0_6, %c0_7], %11 {strides = array<i32>} : memref<32x16xf32, #tpu.memory_space<vmem>>, vector<32x16xf32>,
    return
  }
  func.func @transform_0(%arg0: i32) -> (i32, i32) {
    %c0_i32 = arith.constant 0 : i32
    %c0_i32_0 = arith.constant 0 : i32
    return %arg0, %c0_i32 : i32, i32
  }
  func.func @transform_1(%arg0: i32) -> (i32, i32) {
    %c0_i32 = arith.constant 0 : i32
    %c0_i32_0 = arith.constant 0 : i32
    return %arg0, %c0_i32 : i32, i32
  }
  func.func @transform_2(%arg0: i32) -> (i32, i32) {
    %c0_i32 = arith.constant 0 : i32
    %c0_i32_0 = arith.constant 0 : i32
    return %arg0, %c0_i32 : i32, i32
  }
  func.func @transform_3(%arg0: i32) -> (i32, i32) {
    %c0_i32 = arith.constant 0 : i32
    %c0_i32_0 = arith.constant 0 : i32
    return %arg0, %c0_i32 : i32, i32
  }
}

module attributes {stable_mosaic.version = 11 : i64} {
  func.func @_user_fused_single_kernel(%arg0: i32, %arg1: memref<8x32xi8, #tpu.memory_space<vmem>>, %arg2: memref<32x16xbf16, #tpu.memory_space<vmem>>, %arg3: memref<8x16xf32, #tpu.memory_space<vmem>>, %arg4: memref<4x16xf32, #tpu.memory_space<vmem>>, %arg5: memref<8x16xf32, #tpu.memory_space<vmem>>, %arg6: memref<8x16xf32, #tpu.memory_space<vmem>>, %arg7: memref<8x16xf32, #tpu.memory_space<vmem>>) attributes {dimension_semantics = [#tpu.dimension_semantics<parallel>], iteration_bounds = array<i64: 1>, scalar_prefetch = 0 : i64, scratch_operands = 0 : i64, tpu.core_type = #tpu.core_type<tc>, window_params = [{transform_indices = @transform_0, window_bounds = array<i64: 8, 32>}, {pipeline_mode = #tpu.pipeline_mode<synchronous>, transform_indices = @transform_1, window_bounds = array<i64: 32, 16>}, {transform_indices = @transform_2, window_bounds = array<i64: 8, 16>}, {pipeline_mode = #tpu.pipeline_mode<synchronous>, transform_indices = @transform_3, window_bounds = array<i64: 4, 16>}, {transform_indices = @transform_4, window_bounds = array<i64: 8, 16>}, {transform_indices = @transform_5, window_bounds = array<i64: 8, 16>}, {transform_indices = @transform_6, window_bounds = array<i64: 8, 16>}]} {
    %c0 = arith.constant 0 : index
    %c0_0 = arith.constant 0 : index
    %0 = vector.load %arg1[%c0, %c0_0] : memref<8x32xi8, #tpu.memory_space<vmem>>, vector<8x32xi8>
    %1 = arith.sitofp %0 : vector<8x32xi8> to vector<8x32xf32>
    %2 = arith.truncf %1 : vector<8x32xf32> to vector<8x32xbf16>
    %c0_1 = arith.constant 0 : index
    %c0_2 = arith.constant 0 : index
    %3 = vector.load %arg2[%c0_1, %c0_2] : memref<32x16xbf16, #tpu.memory_space<vmem>>, vector<32x16xbf16>
    %cst = arith.constant dense<0.000000e+00> : vector<8x16xf32>
    %4 = tpu.matmul %2, %3, %cst {dimension_numbers = #tpu.dot_dimension_numbers<[1], [0], [0], [1], [0, 0, 1, 1], [], []>} : vector<8x32xbf16>, vector<32x16xbf16>, vector<8x16xf32> -> vector<8x16xf32>
    %c0_3 = arith.constant 0 : index
    %c0_4 = arith.constant 0 : index
    %5 = vector.load %arg3[%c0_3, %c0_4] : memref<8x16xf32, #tpu.memory_space<vmem>>, vector<8x16xf32>
    %c0_5 = arith.constant 0 : index
    %c0_6 = arith.constant 0 : index
    %6 = vector.load %arg4[%c0_5, %c0_6] : memref<4x16xf32, #tpu.memory_space<vmem>>, vector<4x16xf32>
    %cst_7 = arith.constant dense<0.000000e+00> : vector<8x4xf32>
    %7 = tpu.matmul %5, %6, %cst_7 {dimension_numbers = #tpu.dot_dimension_numbers<[1], [1], [0], [0], [0, 0, 1, 0], [], []>} : vector<8x16xf32>, vector<4x16xf32>, vector<8x4xf32> -> vector<8x4xf32>
    %cst_8 = arith.constant dense<0xFF800000> : vector<8xf32>
    %8 = vector.multi_reduction <maximumf>, %7, %cst_8 [1] : vector<8x4xf32> to vector<8xf32>
    %cst_9 = arith.constant 0xFF800000 : f32
    %9 = vector.broadcast %cst_9 : f32 to vector<8xf32>
    %10 = arith.maximumf %9, %8 : vector<8xf32>
    %11 = vector.shape_cast %10 : vector<8xf32> to vector<8x1xf32>
    %12 = vector.broadcast %11 : vector<8x1xf32> to vector<8x4xf32>
    %13 = arith.subf %7, %12 : vector<8x4xf32>
    %14 = math.exp %13 : vector<8x4xf32>
    %cst_10 = arith.constant dense<0.000000e+00> : vector<8xf32>
    %15 = vector.multi_reduction <add>, %14, %cst_10 [1] : vector<8x4xf32> to vector<8xf32>
    %16 = vector.shape_cast %15 : vector<8xf32> to vector<8x1xf32>
    %17 = vector.broadcast %16 : vector<8x1xf32> to vector<8x4xf32>
    %18 = arith.divf %14, %17 : vector<8x4xf32>
    %cst_11 = arith.constant dense<0.000000e+00> : vector<8x16xf32>
    %19 = tpu.matmul %18, %6, %cst_11 {dimension_numbers = #tpu.dot_dimension_numbers<[1], [0], [0], [1], [0, 0, 1, 1], [], []>} : vector<8x4xf32>, vector<4x16xf32>, vector<8x16xf32> -> vector<8x16xf32>
    %20 = arith.mulf %19, %4 : vector<8x16xf32>
    %21 = arith.addf %4, %20 : vector<8x16xf32>
    %22 = arith.mulf %21, %21 : vector<8x16xf32>
    %cst_12 = arith.constant dense<0.000000e+00> : vector<8xf32>
    %23 = vector.multi_reduction <add>, %22, %cst_12 [1] : vector<8x16xf32> to vector<8xf32>
    %24 = vector.shape_cast %23 : vector<8xf32> to vector<8x1xf32>
    %cst_13 = arith.constant 1.000000e-24 : f32
    %25 = vector.broadcast %cst_13 : f32 to vector<8x1xf32>
    %26 = arith.maximumf %24, %25 : vector<8x1xf32>
    %27 = math.rsqrt %26 : vector<8x1xf32>
    %28 = vector.broadcast %27 : vector<8x1xf32> to vector<8x16xf32>
    %29 = arith.mulf %21, %28 : vector<8x16xf32>
    %c0_14 = arith.constant 0 : index
    %c0_15 = arith.constant 0 : index
    %30 = vector.load %arg6[%c0_14, %c0_15] : memref<8x16xf32, #tpu.memory_space<vmem>>, vector<8x16xf32>
    tpu.vector_store %arg6[%c0_14, %c0_15], %29 {strides = array<i32>} : memref<8x16xf32, #tpu.memory_space<vmem>>, vector<8x16xf32>,
    %c0_16 = arith.constant 0 : index
    %c0_17 = arith.constant 0 : index
    %31 = vector.load %arg5[%c0_16, %c0_17] : memref<8x16xf32, #tpu.memory_space<vmem>>, vector<8x16xf32>
    %32 = arith.addf %31, %29 : vector<8x16xf32>
    %c0_18 = arith.constant 0 : index
    %c0_19 = arith.constant 0 : index
    %33 = vector.load %arg7[%c0_18, %c0_19] : memref<8x16xf32, #tpu.memory_space<vmem>>, vector<8x16xf32>
    tpu.vector_store %arg7[%c0_18, %c0_19], %32 {strides = array<i32>} : memref<8x16xf32, #tpu.memory_space<vmem>>, vector<8x16xf32>,
    return
  }
  func.func @transform_0(%arg0: i32) -> (i32, i32) {
    %c0_i32 = arith.constant 0 : i32
    %c0_i32_0 = arith.constant 0 : i32
    return %arg0, %c0_i32 : i32, i32
  }
  func.func @transform_1(%arg0: i32) -> (i32, i32) {
    %c0_i32 = arith.constant 0 : i32
    %c0_i32_0 = arith.constant 0 : i32
    %c0_i32_1 = arith.constant 0 : i32
    return %c0_i32, %c0_i32_0 : i32, i32
  }
  func.func @transform_2(%arg0: i32) -> (i32, i32) {
    %c0_i32 = arith.constant 0 : i32
    %c0_i32_0 = arith.constant 0 : i32
    return %arg0, %c0_i32 : i32, i32
  }
  func.func @transform_3(%arg0: i32) -> (i32, i32) {
    %c0_i32 = arith.constant 0 : i32
    %c0_i32_0 = arith.constant 0 : i32
    %c0_i32_1 = arith.constant 0 : i32
    return %c0_i32, %c0_i32_0 : i32, i32
  }
  func.func @transform_4(%arg0: i32) -> (i32, i32) {
    %c0_i32 = arith.constant 0 : i32
    %c0_i32_0 = arith.constant 0 : i32
    return %arg0, %c0_i32 : i32, i32
  }
  func.func @transform_5(%arg0: i32) -> (i32, i32) {
    %c0_i32 = arith.constant 0 : i32
    %c0_i32_0 = arith.constant 0 : i32
    return %arg0, %c0_i32 : i32, i32
  }
  func.func @transform_6(%arg0: i32) -> (i32, i32) {
    %c0_i32 = arith.constant 0 : i32
    %c0_i32_0 = arith.constant 0 : i32
    return %arg0, %c0_i32 : i32, i32
  }
}

module attributes {stable_mosaic.version = 11 : i64} {
  func.func @_norm_res_kernel(%arg0: i32, %arg1: memref<32x16xf32, #tpu.memory_space<vmem>>, %arg2: memref<32x16xf32, #tpu.memory_space<vmem>>, %arg3: memref<32x16xf32, #tpu.memory_space<vmem>>, %arg4: memref<32x16xf32, #tpu.memory_space<vmem>>) attributes {dimension_semantics = [#tpu.dimension_semantics<parallel>], iteration_bounds = array<i64: 1>, scalar_prefetch = 0 : i64, scratch_operands = 0 : i64, tpu.core_type = #tpu.core_type<tc>, window_params = [{transform_indices = @transform_0, window_bounds = array<i64: 32, 16>}, {transform_indices = @transform_1, window_bounds = array<i64: 32, 16>}, {transform_indices = @transform_2, window_bounds = array<i64: 32, 16>}, {transform_indices = @transform_3, window_bounds = array<i64: 32, 16>}]} {
    %c0 = arith.constant 0 : index
    %c0_0 = arith.constant 0 : index
    %0 = vector.load %arg1[%c0, %c0_0] : memref<32x16xf32, #tpu.memory_space<vmem>>, vector<32x16xf32>
    %1 = arith.mulf %0, %0 : vector<32x16xf32>
    %cst = arith.constant dense<0.000000e+00> : vector<32xf32>
    %2 = vector.multi_reduction <add>, %1, %cst [1] : vector<32x16xf32> to vector<32xf32>
    %3 = vector.shape_cast %2 : vector<32xf32> to vector<32x1xf32>
    %cst_1 = arith.constant 1.000000e-24 : f32
    %4 = vector.broadcast %cst_1 : f32 to vector<32x1xf32>
    %5 = arith.maximumf %3, %4 : vector<32x1xf32>
    %6 = math.rsqrt %5 : vector<32x1xf32>
    %7 = vector.broadcast %6 : vector<32x1xf32> to vector<32x16xf32>
    %8 = arith.mulf %0, %7 : vector<32x16xf32>
    %c0_2 = arith.constant 0 : index
    %c0_3 = arith.constant 0 : index
    %9 = vector.load %arg3[%c0_2, %c0_3] : memref<32x16xf32, #tpu.memory_space<vmem>>, vector<32x16xf32>
    tpu.vector_store %arg3[%c0_2, %c0_3], %8 {strides = array<i32>} : memref<32x16xf32, #tpu.memory_space<vmem>>, vector<32x16xf32>,
    %c0_4 = arith.constant 0 : index
    %c0_5 = arith.constant 0 : index
    %10 = vector.load %arg2[%c0_4, %c0_5] : memref<32x16xf32, #tpu.memory_space<vmem>>, vector<32x16xf32>
    %11 = arith.addf %10, %8 : vector<32x16xf32>
    %c0_6 = arith.constant 0 : index
    %c0_7 = arith.constant 0 : index
    %12 = vector.load %arg4[%c0_6, %c0_7] : memref<32x16xf32, #tpu.memory_space<vmem>>, vector<32x16xf32>
    tpu.vector_store %arg4[%c0_6, %c0_7], %11 {strides = array<i32>} : memref<32x16xf32, #tpu.memory_space<vmem>>, vector<32x16xf32>,
    return
  }
  func.func @transform_0(%arg0: i32) -> (i32, i32) {
    %c0_i32 = arith.constant 0 : i32
    %c0_i32_0 = arith.constant 0 : i32
    return %arg0, %c0_i32 : i32, i32
  }
  func.func @transform_1(%arg0: i32) -> (i32, i32) {
    %c0_i32 = arith.constant 0 : i32
    %c0_i32_0 = arith.constant 0 : i32
    return %arg0, %c0_i32 : i32, i32
  }
  func.func @transform_2(%arg0: i32) -> (i32, i32) {
    %c0_i32 = arith.constant 0 : i32
    %c0_i32_0 = arith.constant 0 : i32
    return %arg0, %c0_i32 : i32, i32
  }
  func.func @transform_3(%arg0: i32) -> (i32, i32) {
    %c0_i32 = arith.constant 0 : i32
    %c0_i32_0 = arith.constant 0 : i32
    return %arg0, %c0_i32 : i32, i32
  }
}

module attributes {stable_mosaic.version = 11 : i64} {
  func.func @_item_adj_kernel(%arg0: i32, %arg1: i32, %arg2: memref<32x32xbf16, #tpu.memory_space<vmem>>, %arg3: memref<32x1xf32, #tpu.memory_space<vmem>>, %arg4: memref<32x1xf32, #tpu.memory_space<vmem>>, %arg5: memref<1x32xf32, #tpu.memory_space<vmem>>, %arg6: memref<32x32xbf16, #tpu.memory_space<vmem>>, %arg7: memref<32x1xf32, #tpu.memory_space<vmem>>, %arg8: memref<32x1xf32, #tpu.memory_space<vmem>>, %arg9: memref<1x32xf32, #tpu.memory_space<vmem>>, %arg10: memref<32x32xf32, #tpu.memory_space<vmem>>) attributes {dimension_semantics = [#tpu.dimension_semantics<parallel>, #tpu.dimension_semantics<parallel>], iteration_bounds = array<i64: 1, 1>, scalar_prefetch = 0 : i64, scratch_operands = 0 : i64, tpu.core_type = #tpu.core_type<tc>, window_params = [{transform_indices = @transform_0, window_bounds = array<i64: 32, 32>}, {transform_indices = @transform_1, window_bounds = array<i64: 32, 1>}, {transform_indices = @transform_2, window_bounds = array<i64: 32, 1>}, {transform_indices = @transform_3, window_bounds = array<i64: 1, 32>}, {transform_indices = @transform_4, window_bounds = array<i64: 32, 32>}, {transform_indices = @transform_5, window_bounds = array<i64: 32, 1>}, {transform_indices = @transform_6, window_bounds = array<i64: 32, 1>}, {transform_indices = @transform_7, window_bounds = array<i64: 1, 32>}, {transform_indices = @transform_8, window_bounds = array<i64: 32, 32>}]} {
    %c0 = arith.constant 0 : index
    %c0_0 = arith.constant 0 : index
    %0 = vector.load %arg2[%c0, %c0_0] : memref<32x32xbf16, #tpu.memory_space<vmem>>, vector<32x32xbf16>
    %1 = arith.extf %0 : vector<32x32xbf16> to vector<32x32xf32>
    %c0_1 = arith.constant 0 : index
    %c0_2 = arith.constant 0 : index
    %2 = vector.load %arg3[%c0_1, %c0_2] : memref<32x1xf32, #tpu.memory_space<vmem>>, vector<32x1xf32>
    %3 = vector.broadcast %2 : vector<32x1xf32> to vector<32x32xf32>
    %4 = arith.cmpf oge, %1, %3 : vector<32x32xf32>
    %cst = arith.constant 0.000000e+00 : f32
    %5 = vector.broadcast %cst : f32 to vector<32x32xf32>
    %6 = arith.select %4, %1, %5 : vector<32x32xi1>, vector<32x32xf32>
    %c0_3 = arith.constant 0 : index
    %c0_4 = arith.constant 0 : index
    %7 = vector.load %arg4[%c0_3, %c0_4] : memref<32x1xf32, #tpu.memory_space<vmem>>, vector<32x1xf32>
    %8 = vector.broadcast %7 : vector<32x1xf32> to vector<32x32xf32>
    %9 = arith.mulf %6, %8 : vector<32x32xf32>
    %c0_5 = arith.constant 0 : index
    %c0_6 = arith.constant 0 : index
    %10 = vector.load %arg5[%c0_5, %c0_6] : memref<1x32xf32, #tpu.memory_space<vmem>>, vector<1x32xf32>
    %11 = vector.broadcast %10 : vector<1x32xf32> to vector<32x32xf32>
    %12 = arith.mulf %9, %11 : vector<32x32xf32>
    %c0_7 = arith.constant 0 : index
    %c0_8 = arith.constant 0 : index
    %13 = vector.load %arg6[%c0_7, %c0_8] : memref<32x32xbf16, #tpu.memory_space<vmem>>, vector<32x32xbf16>
    %14 = arith.extf %13 : vector<32x32xbf16> to vector<32x32xf32>
    %c0_9 = arith.constant 0 : index
    %c0_10 = arith.constant 0 : index
    %15 = vector.load %arg7[%c0_9, %c0_10] : memref<32x1xf32, #tpu.memory_space<vmem>>, vector<32x1xf32>
    %16 = vector.broadcast %15 : vector<32x1xf32> to vector<32x32xf32>
    %17 = arith.cmpf oge, %14, %16 : vector<32x32xf32>
    %cst_11 = arith.constant 0.000000e+00 : f32
    %18 = vector.broadcast %cst_11 : f32 to vector<32x32xf32>
    %19 = arith.select %17, %14, %18 : vector<32x32xi1>, vector<32x32xf32>
    %c0_12 = arith.constant 0 : index
    %c0_13 = arith.constant 0 : index
    %20 = vector.load %arg8[%c0_12, %c0_13] : memref<32x1xf32, #tpu.memory_space<vmem>>, vector<32x1xf32>
    %21 = vector.broadcast %20 : vector<32x1xf32> to vector<32x32xf32>
    %22 = arith.mulf %19, %21 : vector<32x32xf32>
    %c0_14 = arith.constant 0 : index
    %c0_15 = arith.constant 0 : index
    %23 = vector.load %arg9[%c0_14, %c0_15] : memref<1x32xf32, #tpu.memory_space<vmem>>, vector<1x32xf32>
    %24 = vector.broadcast %23 : vector<1x32xf32> to vector<32x32xf32>
    %25 = arith.mulf %22, %24 : vector<32x32xf32>
    %cst_16 = arith.constant 5.000000e-01 : f32
    %26 = vector.broadcast %cst_16 : f32 to vector<32x32xf32>
    %27 = arith.mulf %26, %12 : vector<32x32xf32>
    %cst_17 = arith.constant 5.000000e-01 : f32
    %28 = vector.broadcast %cst_17 : f32 to vector<32x32xf32>
    %29 = arith.mulf %28, %25 : vector<32x32xf32>
    %30 = arith.addf %27, %29 : vector<32x32xf32>
    %c0_18 = arith.constant 0 : index
    %c0_19 = arith.constant 0 : index
    %31 = vector.load %arg10[%c0_18, %c0_19] : memref<32x32xf32, #tpu.memory_space<vmem>>, vector<32x32xf32>
    tpu.vector_store %arg10[%c0_18, %c0_19], %30 {strides = array<i32>} : memref<32x32xf32, #tpu.memory_space<vmem>>, vector<32x32xf32>,
    return
  }
  func.func @transform_0(%arg0: i32, %arg1: i32) -> (i32, i32) {
    %c0_i32 = arith.constant 0 : i32
    return %arg0, %arg1 : i32, i32
  }
  func.func @transform_1(%arg0: i32, %arg1: i32) -> (i32, i32) {
    %c0_i32 = arith.constant 0 : i32
    %c0_i32_0 = arith.constant 0 : i32
    return %arg0, %c0_i32 : i32, i32
  }
  func.func @transform_2(%arg0: i32, %arg1: i32) -> (i32, i32) {
    %c0_i32 = arith.constant 0 : i32
    %c0_i32_0 = arith.constant 0 : i32
    return %arg0, %c0_i32 : i32, i32
  }
  func.func @transform_3(%arg0: i32, %arg1: i32) -> (i32, i32) {
    %c0_i32 = arith.constant 0 : i32
    %c0_i32_0 = arith.constant 0 : i32
    return %c0_i32, %arg1 : i32, i32
  }
  func.func @transform_4(%arg0: i32, %arg1: i32) -> (i32, i32) {
    %c0_i32 = arith.constant 0 : i32
    return %arg0, %arg1 : i32, i32
  }
  func.func @transform_5(%arg0: i32, %arg1: i32) -> (i32, i32) {
    %c0_i32 = arith.constant 0 : i32
    %c0_i32_0 = arith.constant 0 : i32
    return %arg0, %c0_i32 : i32, i32
  }
  func.func @transform_6(%arg0: i32, %arg1: i32) -> (i32, i32) {
    %c0_i32 = arith.constant 0 : i32
    %c0_i32_0 = arith.constant 0 : i32
    return %arg0, %c0_i32 : i32, i32
  }
  func.func @transform_7(%arg0: i32, %arg1: i32) -> (i32, i32) {
    %c0_i32 = arith.constant 0 : i32
    %c0_i32_0 = arith.constant 0 : i32
    return %c0_i32, %arg1 : i32, i32
  }
  func.func @transform_8(%arg0: i32, %arg1: i32) -> (i32, i32) {
    %c0_i32 = arith.constant 0 : i32
    return %arg0, %arg1 : i32, i32
  }
}

</mosaic_0001>

<llo_original>
// kernel: graph_conv_forward.11
$region0: #{graph_conv_forward.11}
  #allocation0 [shape = 'u32[]', space=smem, size = 0x4, offset = 0x4, fixed_abs, tag = 'smem constant byte address 0x4 - core index']
  #allocation1 [shape = 'u32[144,128]{1,0:T(1,128)}', space=vmem, size = 0x12000, scoped, tag = 'internal scratch']
  %s0 = inlined_call_operand.vmem [shape: f32[32,16], index: 0, kind: input, shape index: {}]
  %s1 = inlined_call_operand.vmem [shape: bf16[32,16], index: 1, kind: output, shape index: {}]
  %s2 = sld [smem:[#allocation0]]
  $region14: #{graph_conv_forward.11} parent=0
    _
  %s4 = ssub.s32 1, %s2
  %s5 = scalar_select 0, %s4, %s2
  // Predicated region
  $region2: #{graph_conv_forward.11} parent=0 // pred_check
    _
  $region3: #{graph_conv_forward.11} parent=0 // pred_check_branch
    %7 = sbr.rel (0) target = $region5
  $region4: #{graph_conv_forward.11} parent=0 // pred_region
    _
  $region5: #{graph_conv_forward.11} parent=0 // pred_fallthru
    _
  %v8 = vld [vmem:[%s0] sm:$0xff]
  %v9 = vld [vmem:[%s0 + $0x8] sm:$0xff]
  %v10 = vld [vmem:[%s0 + $0x10] sm:$0xff]
  %v11 = vld [vmem:[%s0 + $0x18] sm:$0xff]
  %v12 = vmul.f32 %v8, %v8
  %v13 = vmul.f32 %v9, %v9
  %v14 = vmul.f32 %v10, %v10
  %v15 = vmul.f32 %v11, %v11
  %vm16 = vcmask 130048
  %v17 = vsel %vm16, %v12, 0.0
  %18 = vadd.xlane.f32.xlu0 %v17
  %v19 = vpop.xlane.xlu0 %18
  %v20 = vsel %vm16, %v13, 0.0
  %21 = vadd.xlane.f32.xlu0 %v20
  %v22 = vpop.xlane.xlu0 %21
  %v23 = vsel %vm16, %v14, 0.0
  %24 = vadd.xlane.f32.xlu0 %v23
  %v25 = vpop.xlane.xlu0 %24
  %v26 = vsel %vm16, %v15, 0.0
  %27 = vadd.xlane.f32.xlu0 %v26
  %v28 = vpop.xlane.xlu0 %27
  %v29 = vmax.f32 %v19, 1e-24
  %v30 = vmax.f32 %v22, 1e-24
  %v31 = vmax.f32 %v25, 1e-24
  %v32 = vmax.f32 %v28, 1e-24
  %v33 = vrsqrt.pop %v29
  %v34 = vrsqrt.pop %v30
  %v35 = vrsqrt.pop %v31
  %v36 = vrsqrt.pop %v32
  %v37 = vmul.f32 %v8, %v33
  %v38 = vmul.f32 %v9, %v34
  %v39 = vmul.f32 %v10, %v35
  %v40 = vmul.f32 %v11, %v36
  %v41 = vpack.c.bf16 %v38, %v37
  %v42 = vpack.c.bf16 %v40, %v39
  %v45 = vunpack.c.l.b16 %v41
  %v46 = vunpack.c.h.b16 %v41
  %v47 = vunpack.c.l.b16 %v42
  %v48 = vunpack.c.h.b16 %v42
  %v49 = vpack.c.b16 %v45, %v45
  %v50 = vpack.c.b16 %v46, %v46
  %v51 = vpack.c.b16 %v47, %v47
  %v52 = vpack.c.b16 %v48, %v48
  %vm57 = vcmask 125952
  %58 = vst.msk [vmem:[%s1] sm:$0xf] %vm57, %v49
  %59 = vst.msk [vmem:[%s1 + $0x4] sm:$0xf] %vm57, %v50
  %60 = vst.msk [vmem:[%s1 + $0x8] sm:$0xf] %vm57, %v51
  %61 = vst.msk [vmem:[%s1 + $0xc] sm:$0xf] %vm57, %v52
  // Predicated region
  $region6: #{graph_conv_forward.11} parent=0 // pred_check
    _
  $region7: #{graph_conv_forward.11} parent=0 // pred_check_branch
    %63 = sbr.rel (0) target = $region9
  $region8: #{graph_conv_forward.11} parent=0 // pred_region
    _
  $region9: #{graph_conv_forward.11} parent=0 // pred_fallthru
    _
  // Predicated region
  $region10: #{graph_conv_forward.11} parent=0 // pred_check
    _
  $region11: #{graph_conv_forward.11} parent=0 // pred_check_branch
    %65 = sbr.rel (0) target = $region13
  $region12: #{graph_conv_forward.11} parent=0 // pred_region
    _
  $region13: #{graph_conv_forward.11} parent=0 // pred_fallthru
    _

// kernel: graph_conv_forward.12
$region0: #{graph_conv_forward.12}
  #allocation0 [shape = 'u32[]', space=smem, size = 0x4, offset = 0x4, fixed_abs, tag = 'smem constant byte address 0x4 - core index']
  #allocation1 [shape = 'u32[144,128]{1,0:T(1,128)}', space=vmem, size = 0x12000, scoped, tag = 'internal scratch']
  %s0 = inlined_call_operand.vmem [shape: bf16[32,16], index: 0, kind: input, shape index: {}, may-alias: {0,1}]
  %s1 = inlined_call_operand.vmem [shape: bf16[32,16], index: 1, kind: input, shape index: {}, may-alias: {0,1}]
  %s2 = inlined_call_operand.vmem [shape: bf16[32,32], index: 2, kind: output, shape index: {}]
  %s3 = sld [smem:[#allocation0]]
  $region18: #{graph_conv_forward.12} parent=0
    _
  %s5 = ssub.s32 1, %s3
  %s6 = scalar_select 0, %s5, %s3
  // Predicated region
  $region2: #{graph_conv_forward.12} parent=0 // pred_check
    _
  $region3: #{graph_conv_forward.12} parent=0 // pred_check_branch
    %8 = sbr.rel (0) target = $region5
  $region4: #{graph_conv_forward.12} parent=0 // pred_region
    _
  $region5: #{graph_conv_forward.12} parent=0 // pred_fallthru
    _
  // Predicated region
  $region6: #{graph_conv_forward.12} parent=0 // pred_check
    _
  $region7: #{graph_conv_forward.12} parent=0 // pred_check_branch
    %10 = sbr.rel (0) target = $region9
  $region8: #{graph_conv_forward.12} parent=0 // pred_region
    _
  $region9: #{graph_conv_forward.12} parent=0 // pred_fallthru
    _
  %v12 = vld [vmem:[%s0] sm:$0xf]
  %v13 = vld [vmem:[%s0 + $0x4] sm:$0xf]
  %v14 = vld [vmem:[%s0 + $0x8] sm:$0xf]
  %v15 = vld [vmem:[%s0 + $0xc] sm:$0xf]
  %v16 = vld [vmem:[%s1] sm:$0xf]
  %v17 = vld [vmem:[%s1 + $0x4] sm:$0xf]
  %v18 = vld [vmem:[%s1 + $0x8] sm:$0xf]
  %v19 = vld [vmem:[%s1 + $0xc] sm:$0xf]
  %v24 = vunpack.c.l.b16 %v12
  %v25 = vunpack.c.l.b16 %v13
  %v26 = vunpack.c.l.b16 %v14
  %v27 = vunpack.c.l.b16 %v15
  %v28 = vpack.c.b16 %v25, %v24
  %v29 = vpack.c.b16 %v27, %v26
  %v34 = vunpack.c.l.b16 %v16
  %v35 = vunpack.c.l.b16 %v17
  %v36 = vunpack.c.l.b16 %v18
  %v37 = vunpack.c.l.b16 %v19
  %v38 = vpack.c.b16 %v35, %v34
  %v39 = vpack.c.b16 %v37, %v36
  %vm40 = vcmask 130048
  %v42 = vsel %vm40, %v28, 0
  %v45 = vsel %vm40, %v29, 0
  %v48 = vsel %vm40, %v38, 0
  %v51 = vsel %vm40, %v39, 0
  %53 = vmatprep.subr.bf16.mxu0 0
  %54 = vmatpush1.bf16.xpose.msra.mxu0 0
  %55 = vmatprep.subr.bf16.mxu0 0
  %56 = vmatpush1.bf16.xpose.msra.mxu0 0
  %57 = vmatprep.subr.bf16.mxu0 0
  %58 = vmatpush1.bf16.xpose.msra.mxu0 0
  %59 = vmatprep.subr.bf16.mxu0 0
  %60 = vmatpush1.bf16.xpose.msra.mxu0 0
  %61 = vmatprep.subr.bf16.mxu0 0
  %62 = vmatpush1.bf16.xpose.msra.mxu0 0
  %63 = vmatprep.subr.bf16.mxu0 0
  %64 = vmatpush1.bf16.xpose.msra.mxu0 0
  %65 = vmatprep.subr.bf16.mxu0 0
  %66 = vmatpush1.bf16.xpose.msra.mxu0 %v51
  %67 = vmatprep.subr.bf16.mxu0 0
  %68 = vmatpush1.bf16.xpose.msra.mxu0 %v48
  %69 = vmatprep.subr.bf16.mxu0 0
  %70 = vmatpush2.bf16.xpose.msra.mxu0 0
  %71 = vmatprep.subr.bf16.mxu0 0
  %72 = vmatpush2.bf16.xpose.msra.mxu0 0
  %73 = vmatprep.subr.bf16.mxu0 0
  %74 = vmatpush2.bf16.xpose.msra.mxu0 0
  %75 = vmatprep.subr.bf16.mxu0 0
  %76 = vmatpush2.bf16.xpose.msra.mxu0 0
  %77 = vmatprep.subr.bf16.mxu0 0
  %78 = vmatpush2.bf16.xpose.msra.mxu0 0
  %79 = vmatprep.subr.bf16.mxu0 0
  %80 = vmatpush2.bf16.xpose.msra.mxu0 0
  %81 = vmatprep.subr.bf16.mxu0 0
  %82 = vmatpush2.bf16.xpose.msra.mxu0 0
  %83 = vmatprep.subr.bf16.mxu0 0
  %84 = vmatpush2.bf16.xpose.msra.mxu0 0
  %85 = vmatprep.mubr.bf16.mxu0 0
  %86 = vmatmul.mubr.bf16.gmra.mxu0 %v42
  %v87 = vpop.f32.mrf.mxu0
  %v88 = vadd.f32 0.0, %v87
  %v89 = vpop.f32.mrf.mxu0
  %v90 = vpop.f32.mrf.mxu0
  %v91 = vadd.f32 0.0, %v90
  %v92 = vpop.f32.mrf.mxu0
  %93 = vmatprep.mubr.bf16.mxu0 0
  %94 = vmatmul.mubr.bf16.gmra.mxu0 %v45
  %v95 = vpop.f32.mrf.mxu0
  %v96 = vadd.f32 0.0, %v95
  %v97 = vpop.f32.mrf.mxu0
  %v98 = vpop.f32.mrf.mxu0
  %v99 = vadd.f32 0.0, %v98
  %v100 = vpop.f32.mrf.mxu0
  %101 = vdwg.mxu0
  %v102 = vpack.c.bf16 %v91, %v88
  %v103 = vpack.c.bf16 %v99, %v96
  %v106 = vunpack.c.l.b16 %v102
  %v107 = vunpack.c.h.b16 %v102
  %v108 = vunpack.c.l.b16 %v103
  %v109 = vunpack.c.h.b16 %v103
  %v110 = vpack.c.b16 %v106, %v106
  %v111 = vpack.c.b16 %v107, %v107
  %v112 = vpack.c.b16 %v108, %v108
  %v113 = vpack.c.b16 %v109, %v109
  %vm118 = vcmask 257024
  %119 = vst.msk [vmem:[%s2] sm:$0xf] %vm118, %v110
  %120 = vst.msk [vmem:[%s2 + $0x4] sm:$0xf] %vm118, %v111
  %121 = vst.msk [vmem:[%s2 + $0x8] sm:$0xf] %vm118, %v112
  %122 = vst.msk [vmem:[%s2 + $0xc] sm:$0xf] %vm118, %v113
  // Predicated region
  $region10: #{graph_conv_forward.12} parent=0 // pred_check
    _
  $region11: #{graph_conv_forward.12} parent=0 // pred_check_branch
    %124 = sbr.rel (0) target = $region13
  $region12: #{graph_conv_forward.12} parent=0 // pred_region
    _
  $region13: #{graph_conv_forward.12} parent=0 // pred_fallthru
    _
  // Predicated region
  $region14: #{graph_conv_forward.12} parent=0 // pred_check
    _
  $region15: #{graph_conv_forward.12} parent=0 // pred_check_branch
    %126 = sbr.rel (0) target = $region17
  $region16: #{graph_conv_forward.12} parent=0 // pred_region
    _
  $region17: #{graph_conv_forward.12} parent=0 // pred_fallthru
    _

// kernel: graph_conv_forward.14
$region0: #{graph_conv_forward.14}
  #allocation0 [shape = 'u32[]', space=smem, size = 0x4, offset = 0x4, fixed_abs, tag = 'smem constant byte address 0x4 - core index']
  #allocation1 [shape = 'u32[144,128]{1,0:T(1,128)}', space=vmem, size = 0x12000, scoped, tag = 'internal scratch']
  %s0 = inlined_call_operand.vmem [shape: s8[8,32], index: 0, kind: input, shape index: {}]
  %s1 = inlined_call_operand.vmem [shape: bf16[32,16], index: 1, kind: input, shape index: {}]
  %s2 = inlined_call_operand.vmem [shape: f32[8,16], index: 2, kind: input, shape index: {}, may-alias: {2,4}]
  %s3 = inlined_call_operand.vmem [shape: f32[4,16], index: 3, kind: input, shape index: {}]
  %s4 = inlined_call_operand.vmem [shape: f32[8,16], index: 4, kind: input, shape index: {}, may-alias: {2,4}]
  %s5 = inlined_call_operand.vmem [shape: f32[8,16], index: 5, kind: output, shape index: {0}]
  %s6 = inlined_call_operand.vmem [shape: f32[8,16], index: 6, kind: output, shape index: {1}]
  %7 = xla_tuple %s5, %s6
  %s8 = sld [smem:[#allocation0]]
  $region38: #{graph_conv_forward.14} parent=0
    _
  %s10 = ssub.s32 1, %s8
  %s11 = scalar_select 0, %s10, %s8
  // Predicated region
  $region2: #{graph_conv_forward.14} parent=0 // pred_check
    _
  $region3: #{graph_conv_forward.14} parent=0 // pred_check_branch
    %13 = sbr.rel (0) target = $region5
  $region4: #{graph_conv_forward.14} parent=0 // pred_region
    _
  $region5: #{graph_conv_forward.14} parent=0 // pred_fallthru
    _
  // Predicated region
  $region6: #{graph_conv_forward.14} parent=0 // pred_check
    _
  $region7: #{graph_conv_forward.14} parent=0 // pred_check_branch
    %15 = sbr.rel (0) target = $region9
  $region8: #{graph_conv_forward.14} parent=0 // pred_region
    _
  $region9: #{graph_conv_forward.14} parent=0 // pred_fallthru
    _
  // Predicated region
  $region10: #{graph_conv_forward.14} parent=0 // pred_check
    _
  $region11: #{graph_conv_forward.14} parent=0 // pred_check_branch
    %17 = sbr.rel (0) target = $region13
  $region12: #{graph_conv_forward.14} parent=0 // pred_region
    _
  $region13: #{graph_conv_forward.14} parent=0 // pred_fallthru
    _
  // Predicated region
  $region14: #{graph_conv_forward.14} parent=0 // pred_check
    _
  $region15: #{graph_conv_forward.14} parent=0 // pred_check_branch
    %19 = sbr.rel (0) target = $region17
  $region16: #{graph_conv_forward.14} parent=0 // pred_region
    _
  $region17: #{graph_conv_forward.14} parent=0 // pred_fallthru
    _
  // Predicated region
  $region18: #{graph_conv_forward.14} parent=0 // pred_check
    _
  $region19: #{graph_conv_forward.14} parent=0 // pred_check_branch
    %21 = sbr.rel (0) target = $region21
  $region20: #{graph_conv_forward.14} parent=0 // pred_region
    _
  $region21: #{graph_conv_forward.14} parent=0 // pred_fallthru
    _
  %v23 = vld [vmem:[%s0] sm:$0x3]
  %v24 = vunpack.c.l.s8.bf16 %v23
  %v25 = vld [vmem:[%s1] sm:$0xf]
  %v26 = vld [vmem:[%s1 + $0x4] sm:$0xf]
  %v27 = vld [vmem:[%s1 + $0x8] sm:$0xf]
  %v28 = vld [vmem:[%s1 + $0xc] sm:$0xf]
  %v33 = vunpack.c.l.b16 %v25
  %v34 = vunpack.c.l.b16 %v26
  %v35 = vunpack.c.l.b16 %v27
  %v36 = vunpack.c.l.b16 %v28
  %v37 = vpack.c.b16 %v34, %v33
  %v38 = vpack.c.b16 %v36, %v35
  %vm41 = vcmask 261120
  %v43 = vsel %vm41, %v24, 0
  %45 = vmatprep.subr.bf16.mxu0 0
  %46 = vmatpush1.bf16.msra.mxu0 0
  %47 = vmatprep.subr.bf16.mxu0 0
  %48 = vmatpush1.bf16.msra.mxu0 0
  %49 = vmatprep.subr.bf16.mxu0 0
  %50 = vmatpush1.bf16.msra.mxu0 0
  %51 = vmatprep.subr.bf16.mxu0 0
  %52 = vmatpush1.bf16.msra.mxu0 0
  %53 = vmatprep.subr.bf16.mxu0 0
  %54 = vmatpush1.bf16.msra.mxu0 0
  %55 = vmatprep.subr.bf16.mxu0 0
  %56 = vmatpush1.bf16.msra.mxu0 0
  %57 = vmatprep.subr.bf16.mxu0 0
  %58 = vmatpush1.bf16.msra.mxu0 %v38
  %59 = vmatprep.subr.bf16.mxu0 0
  %60 = vmatpush1.bf16.msra.mxu0 %v37
  %61 = vmatprep.subr.bf16.mxu0 0
  %62 = vmatpush2.bf16.msra.mxu0 0
  %63 = vmatprep.subr.bf16.mxu0 0
  %64 = vmatpush2.bf16.msra.mxu0 0
  %65 = vmatprep.subr.bf16.mxu0 0
  %66 = vmatpush2.bf16.msra.mxu0 0
  %67 = vmatprep.subr.bf16.mxu0 0
  %68 = vmatpush2.bf16.msra.mxu0 0
  %69 = vmatprep.subr.bf16.mxu0 0
  %70 = vmatpush2.bf16.msra.mxu0 0
  %71 = vmatprep.subr.bf16.mxu0 0
  %72 = vmatpush2.bf16.msra.mxu0 0
  %73 = vmatprep.subr.bf16.mxu0 0
  %74 = vmatpush2.bf16.msra.mxu0 0
  %75 = vmatprep.subr.bf16.mxu0 0
  %76 = vmatpush2.bf16.msra.mxu0 0
  %77 = vmatprep.mubr.bf16.mxu0 0
  %78 = vmatmul.mubr.bf16.gmra.mxu0 %v43
  %v79 = vpop.f32.mrf.mxu0
  %v80 = vadd.f32 0.0, %v79
  %v81 = vpop.f32.mrf.mxu0
  %v82 = vpop.f32.mrf.mxu0
  %v83 = vpop.f32.mrf.mxu0
  %84 = vdwg.mxu0
  %v85 = vld [vmem:[%s2] sm:$0xff]
  %v86 = vld [vmem:[%s3] sm:$0xf]
  %vm87 = vcmask 130048
  %v89 = vsel %vm87, %v85, 0
  %v92 = vsel %vm87, %v86, 0
  %94 = vmatprep.subr.mxu0 0.0
  %95 = vmatpush1.xpose.msra.mxu0 0.0
  %96 = vmatprep.subr.mxu0 0.0
  %97 = vmatpush1.xpose.msra.mxu0 0.0
  %98 = vmatprep.subr.mxu0 0.0
  %99 = vmatpush1.xpose.msra.mxu0 0.0
  %100 = vmatprep.subr.mxu0 0.0
  %101 = vmatpush1.xpose.msra.mxu0 0.0
  %102 = vmatprep.subr.mxu0 0.0
  %103 = vmatpush1.xpose.msra.mxu0 0.0
  %104 = vmatprep.subr.mxu0 0.0
  %105 = vmatpush1.xpose.msra.mxu0 0.0
  %106 = vmatprep.subr.mxu0 0.0
  %107 = vmatpush1.xpose.msra.mxu0 0.0
  %108 = vmatprep.subr.mxu0 0.0
  %109 = vmatpush1.xpose.msra.mxu0 0.0
  %110 = vmatprep.subr.mxu0 0.0
  %111 = vmatpush1.xpose.msra.mxu0 0.0
  %112 = vmatprep.subr.mxu0 0.0
  %113 = vmatpush1.xpose.msra.mxu0 0.0
  %114 = vmatprep.subr.mxu0 0.0
  %115 = vmatpush1.xpose.msra.mxu0 0.0
  %116 = vmatprep.subr.mxu0 0.0
  %117 = vmatpush1.xpose.msra.mxu0 0.0
  %118 = vmatprep.subr.mxu0 0.0
  %119 = vmatpush1.xpose.msra.mxu0 0.0
  %120 = vmatprep.subr.mxu0 0.0
  %121 = vmatpush1.xpose.msra.mxu0 0.0
  %122 = vmatprep.subr.mxu0 0.0
  %123 = vmatpush1.xpose.msra.mxu0 0.0
  %124 = vmatprep.subr.mxu0 0.0
  %125 = vmatpush1.xpose.msra.mxu0 %v92
  %126 = vmatprep.subr.mxu0 0.0
  %127 = vmatpush2.xpose.msra.mxu0 0.0
  %128 = vmatprep.subr.mxu0 0.0
  %129 = vmatpush2.xpose.msra.mxu0 0.0
  %130 = vmatprep.subr.mxu0 0.0
  %131 = vmatpush2.xpose.msra.mxu0 0.0
  %132 = vmatprep.subr.mxu0 0.0
  %133 = vmatpush2.xpose.msra.mxu0 0.0
  %134 = vmatprep.subr.mxu0 0.0
  %135 = vmatpush2.xpose.msra.mxu0 0.0
  %136 = vmatprep.subr.mxu0 0.0
  %137 = vmatpush2.xpose.msra.mxu0 0.0
  %138 = vmatprep.subr.mxu0 0.0
  %139 = vmatpush2.xpose.msra.mxu0 0.0
  %140 = vmatprep.subr.mxu0 0.0
  %141 = vmatpush2.xpose.msra.mxu0 0.0
  %142 = vmatprep.subr.mxu0 0.0
  %143 = vmatpush2.xpose.msra.mxu0 0.0
  %144 = vmatprep.subr.mxu0 0.0
  %145 = vmatpush2.xpose.msra.mxu0 0.0
  %146 = vmatprep.subr.mxu0 0.0
  %147 = vmatpush2.xpose.msra.mxu0 0.0
  %148 = vmatprep.subr.mxu0 0.0
  %149 = vmatpush2.xpose.msra.mxu0 0.0
  %150 = vmatprep.subr.mxu0 0.0
  %151 = vmatpush2.xpose.msra.mxu0 0.0
  %152 = vmatprep.subr.mxu0 0.0
  %153 = vmatpush2.xpose.msra.mxu0 0.0
  %154 = vmatprep.subr.mxu0 0.0
  %155 = vmatpush2.xpose.msra.mxu0 0.0
  %156 = vmatprep.subr.mxu0 0.0
  %157 = vmatpush2.xpose.msra.mxu0 0.0
  %158 = vmatprep.mubr.f32.mxu0 0.0
  %159 = vmatmul.mubr.f32.gmra.mxu0 %v89
  %v160 = vpop.f32.mrf.mxu0
  %v161 = vadd.f32 0.0, %v160
  %v162 = vpop.f32.mrf.mxu0
  %163 = vdwg.mxu0
  %vm164 = vcmask 31744
  %v165 = vsel %vm164, %v161, -inf
  %166 = vmax.xlane.f32.xlu0 %v165
  %v167 = vpop.xlane.xlu0 %166
  %v168 = vsub.f32 %v161, %v167
  %v169 = vmul.f32 %v168, 1.442695
  %v170 = vpow.pop %v169
  %v171 = vsel %vm164, %v170, 0.0
  %172 = vadd.xlane.f32.xlu0 %v171
  %v173 = vpop.xlane.xlu0 %172
  %v174 = vrcp.pop %v173
  %v175 = vmul.f32 %v170, %v174
  %v177 = vsel %vm164, %v175, 0
  %vm179 = vcmask 1043456
  %v180 = vsel %vm179, %v86, 0
  %182 = vmatprep.subr.mxu0 0.0
  %183 = vmatpush1.msra.mxu0 0.0
  %184 = vmatprep.subr.mxu0 0.0
  %185 = vmatpush1.msra.mxu0 0.0
  %186 = vmatprep.subr.mxu0 0.0
  %187 = vmatpush1.msra.mxu0 0.0
  %188 = vmatprep.subr.mxu0 0.0
  %189 = vmatpush1.msra.mxu0 0.0
  %190 = vmatprep.subr.mxu0 0.0
  %191 = vmatpush1.msra.mxu0 0.0
  %192 = vmatprep.subr.mxu0 0.0
  %193 = vmatpush1.msra.mxu0 0.0
  %194 = vmatprep.subr.mxu0 0.0
  %195 = vmatpush1.msra.mxu0 0.0
  %196 = vmatprep.subr.mxu0 0.0
  %197 = vmatpush1.msra.mxu0 0.0
  %198 = vmatprep.subr.mxu0 0.0
  %199 = vmatpush1.msra.mxu0 0.0
  %200 = vmatprep.subr.mxu0 0.0
  %201 = vmatpush1.msra.mxu0 0.0
  %202 = vmatprep.subr.mxu0 0.0
  %203 = vmatpush1.msra.mxu0 0.0
  %204 = vmatprep.subr.mxu0 0.0
  %205 = vmatpush1.msra.mxu0 0.0
  %206 = vmatprep.subr.mxu0 0.0
  %207 = vmatpush1.msra.mxu0 0.0
  %208 = vmatprep.subr.mxu0 0.0
  %209 = vmatpush1.msra.mxu0 0.0
  %210 = vmatprep.subr.mxu0 0.0
  %211 = vmatpush1.msra.mxu0 0.0
  %212 = vmatprep.subr.mxu0 0.0
  %213 = vmatpush1.msra.mxu0 %v180
  %214 = vmatprep.subr.mxu0 0.0
  %215 = vmatpush2.msra.mxu0 0.0
  %216 = vmatprep.subr.mxu0 0.0
  %217 = vmatpush2.msra.mxu0 0.0
  %218 = vmatprep.subr.mxu0 0.0
  %219 = vmatpush2.msra.mxu0 0.0
  %220 = vmatprep.subr.mxu0 0.0
  %221 = vmatpush2.msra.mxu0 0.0
  %222 = vmatprep.subr.mxu0 0.0
  %223 = vmatpush2.msra.mxu0 0.0
  %224 = vmatprep.subr.mxu0 0.0
  %225 = vmatpush2.msra.mxu0 0.0
  %226 = vmatprep.subr.mxu0 0.0
  %227 = vmatpush2.msra.mxu0 0.0
  %228 = vmatprep.subr.mxu0 0.0
  %229 = vmatpush2.msra.mxu0 0.0
  %230 = vmatprep.subr.mxu0 0.0
  %231 = vmatpush2.msra.mxu0 0.0
  %232 = vmatprep.subr.mxu0 0.0
  %233 = vmatpush2.msra.mxu0 0.0
  %234 = vmatprep.subr.mxu0 0.0
  %235 = vmatpush2.msra.mxu0 0.0
  %236 = vmatprep.subr.mxu0 0.0
  %237 = vmatpush2.msra.mxu0 0.0
  %238 = vmatprep.subr.mxu0 0.0
  %239 = vmatpush2.msra.mxu0 0.0
  %240 = vmatprep.subr.mxu0 0.0
  %241 = vmatpush2.msra.mxu0 0.0
  %242 = vmatprep.subr.mxu0 0.0
  %243 = vmatpush2.msra.mxu0 0.0
  %244 = vmatprep.subr.mxu0 0.0
  %245 = vmatpush2.msra.mxu0 0.0
  %246 = vmatprep.mubr.f32.mxu0 0.0
  %247 = vmatmul.mubr.f32.gmra.mxu0 %v177
  %v248 = vpop.f32.mrf.mxu0
  %v249 = vadd.f32 0.0, %v248
  %v250 = vpop.f32.mrf.mxu0
  %251 = vdwg.mxu0
  %v252 = vmul.f32 %v249, %v80
  %v253 = vadd.f32 %v80, %v252
  %v254 = vmul.f32 %v253, %v253
  %v255 = vsel %vm87, %v254, 0.0
  %256 = vadd.xlane.f32.xlu0 %v255
  %v257 = vpop.xlane.xlu0 %256
  %v258 = vmax.f32 %v257, 1e-24
  %v259 = vrsqrt.pop %v258
  %v260 = vmul.f32 %v253, %v259
  %261 = vst.msk [vmem:[%s5] sm:$0xff] %vm87, %v260
  %v262 = vld [vmem:[%s4] sm:$0xff]
  %v263 = vadd.f32 %v262, %v260
  %264 = vst.msk [vmem:[%s6] sm:$0xff] %vm87, %v263
  // Predicated region
  $region22: #{graph_conv_forward.14} parent=0 // pred_check
    _
  $region23: #{graph_conv_forward.14} parent=0 // pred_check_branch
    %266 = sbr.rel (0) target = $region25
  $region24: #{graph_conv_forward.14} parent=0 // pred_region
    _
  $region25: #{graph_conv_forward.14} parent=0 // pred_fallthru
    _
  // Predicated region
  $region26: #{graph_conv_forward.14} parent=0 // pred_check
    _
  $region27: #{graph_conv_forward.14} parent=0 // pred_check_branch
    %268 = sbr.rel (0) target = $region29
  $region28: #{graph_conv_forward.14} parent=0 // pred_region
    _
  $region29: #{graph_conv_forward.14} parent=0 // pred_fallthru
    _
  // Predicated region
  $region30: #{graph_conv_forward.14} parent=0 // pred_check
    _
  $region31: #{graph_conv_forward.14} parent=0 // pred_check_branch
    %270 = sbr.rel (0) target = $region33
  $region32: #{graph_conv_forward.14} parent=0 // pred_region
    _
  $region33: #{graph_conv_forward.14} parent=0 // pred_fallthru
    _
  // Predicated region
  $region34: #{graph_conv_forward.14} parent=0 // pred_check
    _
  $region35: #{graph_conv_forward.14} parent=0 // pred_check_branch
    %272 = sbr.rel (0) target = $region37
  $region36: #{graph_conv_forward.14} parent=0 // pred_region
    _
  $region37: #{graph_conv_forward.14} parent=0 // pred_fallthru
    _

// kernel: graph_conv_forward.13
$region0: #{graph_conv_forward.13}
  #allocation0 [shape = 'u32[]', space=smem, size = 0x4, offset = 0x4, fixed_abs, tag = 'smem constant byte address 0x4 - core index']
  #allocation1 [shape = 'u32[144,128]{1,0:T(1,128)}', space=vmem, size = 0x12000, scoped, tag = 'internal scratch']
  %s0 = inlined_call_operand.vmem [shape: f32[64,16], index: 0, kind: input, shape index: {}]
  %s1 = inlined_call_operand.vmem [shape: f32[64,16], index: 1, kind: input, shape index: {}]
  %s2 = inlined_call_operand.vmem [shape: f32[64,16], index: 2, kind: input, shape index: {}]
  %s3 = inlined_call_operand.vmem [shape: f32[64,16], index: 3, kind: output, shape index: {0}]
  %s4 = inlined_call_operand.vmem [shape: f32[64,1], index: 4, kind: output, shape index: {1}]
  %5 = xla_tuple %s3, %s4
  %s6 = sld [smem:[#allocation0]]
  $region30: #{graph_conv_forward.13} parent=0
    _
  %s8 = ssub.s32 1, %s6
  %s9 = scalar_select 0, %s8, %s6
  // Predicated region
  $region2: #{graph_conv_forward.13} parent=0 // pred_check
    _
  $region3: #{graph_conv_forward.13} parent=0 // pred_check_branch
    %11 = sbr.rel (0) target = $region5
  $region4: #{graph_conv_forward.13} parent=0 // pred_region
    _
  $region5: #{graph_conv_forward.13} parent=0 // pred_fallthru
    _
  // Predicated region
  $region6: #{graph_conv_forward.13} parent=0 // pred_check
    _
  $region7: #{graph_conv_forward.13} parent=0 // pred_check_branch
    %13 = sbr.rel (0) target = $region9
  $region8: #{graph_conv_forward.13} parent=0 // pred_region
    _
  $region9: #{graph_conv_forward.13} parent=0 // pred_fallthru
    _
  // Predicated region
  $region10: #{graph_conv_forward.13} parent=0 // pred_check
    _
  $region11: #{graph_conv_forward.13} parent=0 // pred_check_branch
    %15 = sbr.rel (0) target = $region13
  $region12: #{graph_conv_forward.13} parent=0 // pred_region
    _
  $region13: #{graph_conv_forward.13} parent=0 // pred_fallthru
    _
  %v16 = vld [vmem:[%s0] sm:$0xff]
  %v17 = vld [vmem:[%s0 + $0x8] sm:$0xff]
  %v18 = vld [vmem:[%s0 + $0x10] sm:$0xff]
  %v19 = vld [vmem:[%s0 + $0x18] sm:$0xff]
  %v20 = vld [vmem:[%s0 + $0x20] sm:$0xff]
  %v21 = vld [vmem:[%s0 + $0x28] sm:$0xff]
  %v22 = vld [vmem:[%s0 + $0x30] sm:$0xff]
  %v23 = vld [vmem:[%s0 + $0x38] sm:$0xff]
  %v24 = vld [vmem:[%s1] sm:$0xff]
  %v25 = vld [vmem:[%s1 + $0x8] sm:$0xff]
  %v26 = vld [vmem:[%s1 + $0x10] sm:$0xff]
  %v27 = vld [vmem:[%s1 + $0x18] sm:$0xff]
  %v28 = vld [vmem:[%s1 + $0x20] sm:$0xff]
  %v29 = vld [vmem:[%s1 + $0x28] sm:$0xff]
  %v30 = vld [vmem:[%s1 + $0x30] sm:$0xff]
  %v31 = vld [vmem:[%s1 + $0x38] sm:$0xff]
  %v32 = vld [vmem:[%s2] sm:$0xff]
  %v33 = vld [vmem:[%s2 + $0x8] sm:$0xff]
  %v34 = vld [vmem:[%s2 + $0x10] sm:$0xff]
  %v35 = vld [vmem:[%s2 + $0x18] sm:$0xff]
  %v36 = vld [vmem:[%s2 + $0x20] sm:$0xff]
  %v37 = vld [vmem:[%s2 + $0x28] sm:$0xff]
  %v38 = vld [vmem:[%s2 + $0x30] sm:$0xff]
  %v39 = vld [vmem:[%s2 + $0x38] sm:$0xff]
  %v40 = vmul.f32 %v24, %v32
  %v41 = vmul.f32 %v25, %v33
  %v42 = vmul.f32 %v26, %v34
  %v43 = vmul.f32 %v27, %v35
  %v44 = vmul.f32 %v28, %v36
  %v45 = vmul.f32 %v29, %v37
  %v46 = vmul.f32 %v30, %v38
  %v47 = vmul.f32 %v31, %v39
  %v48 = vmul.f32 %v16, %v32
  %v49 = vmul.f32 %v17, %v33
  %v50 = vmul.f32 %v18, %v34
  %v51 = vmul.f32 %v19, %v35
  %v52 = vmul.f32 %v20, %v36
  %v53 = vmul.f32 %v21, %v37
  %v54 = vmul.f32 %v22, %v38
  %v55 = vmul.f32 %v23, %v39
  %vm56 = vcmask 130048
  %57 = vst.msk [vmem:[%s3] sm:$0xff] %vm56, %v40
  %58 = vst.msk [vmem:[%s3 + $0x8] sm:$0xff] %vm56, %v41
  %59 = vst.msk [vmem:[%s3 + $0x10] sm:$0xff] %vm56, %v42
  %60 = vst.msk [vmem:[%s3 + $0x18] sm:$0xff] %vm56, %v43
  %61 = vst.msk [vmem:[%s3 + $0x20] sm:$0xff] %vm56, %v44
  %62 = vst.msk [vmem:[%s3 + $0x28] sm:$0xff] %vm56, %v45
  %63 = vst.msk [vmem:[%s3 + $0x30] sm:$0xff] %vm56, %v46
  %64 = vst.msk [vmem:[%s3 + $0x38] sm:$0xff] %vm56, %v47
  %v65 = vmul.f32 %v48, %v48
  %v66 = vmul.f32 %v49, %v49
  %v67 = vmul.f32 %v50, %v50
  %v68 = vmul.f32 %v51, %v51
  %v69 = vmul.f32 %v52, %v52
  %v70 = vmul.f32 %v53, %v53
  %v71 = vmul.f32 %v54, %v54
  %v72 = vmul.f32 %v55, %v55
  %v73 = vsel %vm56, %v65, 0.0
  %74 = vadd.xlane.f32.xlu0 %v73
  %v75 = vpop.xlane.xlu0 %74
  %v76 = vsel %vm56, %v66, 0.0
  %77 = vadd.xlane.f32.xlu0 %v76
  %v78 = vpop.xlane.xlu0 %77
  %v79 = vsel %vm56, %v67, 0.0
  %80 = vadd.xlane.f32.xlu0 %v79
  %v81 = vpop.xlane.xlu0 %80
  %v82 = vsel %vm56, %v68, 0.0
  %83 = vadd.xlane.f32.xlu0 %v82
  %v84 = vpop.xlane.xlu0 %83
  %v85 = vsel %vm56, %v69, 0.0
  %86 = vadd.xlane.f32.xlu0 %v85
  %v87 = vpop.xlane.xlu0 %86
  %v88 = vsel %vm56, %v70, 0.0
  %89 = vadd.xlane.f32.xlu0 %v88
  %v90 = vpop.xlane.xlu0 %89
  %v91 = vsel %vm56, %v71, 0.0
  %92 = vadd.xlane.f32.xlu0 %v91
  %v93 = vpop.xlane.xlu0 %92
  %v94 = vsel %vm56, %v72, 0.0
  %95 = vadd.xlane.f32.xlu0 %v94
  %v96 = vpop.xlane.xlu0 %95
  %v97 = vmul.f32 %v40, %v40
  %v98 = vmul.f32 %v41, %v41
  %v99 = vmul.f32 %v42, %v42
  %v100 = vmul.f32 %v43, %v43
  %v101 = vmul.f32 %v44, %v44
  %v102 = vmul.f32 %v45, %v45
  %v103 = vmul.f32 %v46, %v46
  %v104 = vmul.f32 %v47, %v47
  %v105 = vsel %vm56, %v97, 0.0
  %106 = vadd.xlane.f32.xlu0 %v105
  %v107 = vpop.xlane.xlu0 %106
  %v108 = vsel %vm56, %v98, 0.0
  %109 = vadd.xlane.f32.xlu0 %v108
  %v110 = vpop.xlane.xlu0 %109
  %v111 = vsel %vm56, %v99, 0.0
  %112 = vadd.xlane.f32.xlu0 %v111
  %v113 = vpop.xlane.xlu0 %112
  %v114 = vsel %vm56, %v100, 0.0
  %115 = vadd.xlane.f32.xlu0 %v114
  %v116 = vpop.xlane.xlu0 %115
  %v117 = vsel %vm56, %v101, 0.0
  %118 = vadd.xlane.f32.xlu0 %v117
  %v119 = vpop.xlane.xlu0 %118
  %v120 = vsel %vm56, %v102, 0.0
  %121 = vadd.xlane.f32.xlu0 %v120
  %v122 = vpop.xlane.xlu0 %121
  %v123 = vsel %vm56, %v103, 0.0
  %124 = vadd.xlane.f32.xlu0 %v123
  %v125 = vpop.xlane.xlu0 %124
  %v126 = vsel %vm56, %v104, 0.0
  %127 = vadd.xlane.f32.xlu0 %v126
  %v128 = vpop.xlane.xlu0 %127
  %v129 = vmul.f32 %v75, %v107
  %v130 = vmul.f32 %v78, %v110
  %v131 = vmul.f32 %v81, %v113
  %v132 = vmul.f32 %v84, %v116
  %v133 = vmul.f32 %v87, %v119
  %v134 = vmul.f32 %v90, %v122
  %v135 = vmul.f32 %v93, %v125
  %v136 = vmul.f32 %v96, %v128
  %vm137 = vcmask 7168
  %138 = vst.msk [vmem:[%s4] sm:$0xff] %vm137, %v129
  %139 = vst.msk [vmem:[%s4 + $0x8] sm:$0xff] %vm137, %v130
  %140 = vst.msk [vmem:[%s4 + $0x10] sm:$0xff] %vm137, %v131
  %141 = vst.msk [vmem:[%s4 + $0x18] sm:$0xff] %vm137, %v132
  %142 = vst.msk [vmem:[%s4 + $0x20] sm:$0xff] %vm137, %v133
  %143 = vst.msk [vmem:[%s4 + $0x28] sm:$0xff] %vm137, %v134
  %144 = vst.msk [vmem:[%s4 + $0x30] sm:$0xff] %vm137, %v135
  %145 = vst.msk [vmem:[%s4 + $0x38] sm:$0xff] %vm137, %v136
  // Predicated region
  $region14: #{graph_conv_forward.13} parent=0 // pred_check
    _
  $region15: #{graph_conv_forward.13} parent=0 // pred_check_branch
    %147 = sbr.rel (0) target = $region17
  $region16: #{graph_conv_forward.13} parent=0 // pred_region
    _
  $region17: #{graph_conv_forward.13} parent=0 // pred_fallthru
    _
  // Predicated region
  $region18: #{graph_conv_forward.13} parent=0 // pred_check
    _
  $region19: #{graph_conv_forward.13} parent=0 // pred_check_branch
    %149 = sbr.rel (0) target = $region21
  $region20: #{graph_conv_forward.13} parent=0 // pred_region
    _
  $region21: #{graph_conv_forward.13} parent=0 // pred_fallthru
    _
  // Predicated region
  $region22: #{graph_conv_forward.13} parent=0 // pred_check
    _
  $region23: #{graph_conv_forward.13} parent=0 // pred_check_branch
    %151 = sbr.rel (0) target = $region25
  $region24: #{graph_conv_forward.13} parent=0 // pred_region
    _
  $region25: #{graph_conv_forward.13} parent=0 // pred_fallthru
    _
  // Predicated region
  $region26: #{graph_conv_forward.13} parent=0 // pred_check
    _
  $region27: #{graph_conv_forward.13} parent=0 // pred_check_branch
    %153 = sbr.rel (0) target = $region29
  $region28: #{graph_conv_forward.13} parent=0 // pred_region
    _
  $region29: #{graph_conv_forward.13} parent=0 // pred_fallthru
    _

// kernel: graph_conv_forward.15
$region0: #{graph_conv_forward.15}
  #allocation0 [shape = 'u32[]', space=smem, size = 0x4, offset = 0x4, fixed_abs, tag = 'smem constant byte address 0x4 - core index']
  #allocation1 [shape = 'u32[144,128]{1,0:T(1,128)}', space=vmem, size = 0x12000, scoped, tag = 'internal scratch']
  %s0 = inlined_call_operand.vmem [shape: f32[32,16], index: 0, kind: input, shape index: {}]
  %s1 = inlined_call_operand.vmem [shape: f32[32,16], index: 1, kind: input, shape index: {}]
  %s2 = inlined_call_operand.vmem [shape: f32[32,16], index: 2, kind: output, shape index: {0}]
  %s3 = inlined_call_operand.vmem [shape: f32[32,16], index: 3, kind: output, shape index: {1}]
  %4 = xla_tuple %s2, %s3
  %s5 = sld [smem:[#allocation0]]
  $region26: #{graph_conv_forward.15} parent=0
    _
  %s7 = ssub.s32 1, %s5
  %s8 = scalar_select 0, %s7, %s5
  // Predicated region
  $region2: #{graph_conv_forward.15} parent=0 // pred_check
    _
  $region3: #{graph_conv_forward.15} parent=0 // pred_check_branch
    %10 = sbr.rel (0) target = $region5
  $region4: #{graph_conv_forward.15} parent=0 // pred_region
    _
  $region5: #{graph_conv_forward.15} parent=0 // pred_fallthru
    _
  // Predicated region
  $region6: #{graph_conv_forward.15} parent=0 // pred_check
    _
  $region7: #{graph_conv_forward.15} parent=0 // pred_check_branch
    %12 = sbr.rel (0) target = $region9
  $region8: #{graph_conv_forward.15} parent=0 // pred_region
    _
  $region9: #{graph_conv_forward.15} parent=0 // pred_fallthru
    _
  %v13 = vld [vmem:[%s0] sm:$0xff]
  %v14 = vld [vmem:[%s0 + $0x8] sm:$0xff]
  %v15 = vld [vmem:[%s0 + $0x10] sm:$0xff]
  %v16 = vld [vmem:[%s0 + $0x18] sm:$0xff]
  %v17 = vmul.f32 %v13, %v13
  %v18 = vmul.f32 %v14, %v14
  %v19 = vmul.f32 %v15, %v15
  %v20 = vmul.f32 %v16, %v16
  %vm21 = vcmask 130048
  %v22 = vsel %vm21, %v17, 0.0
  %23 = vadd.xlane.f32.xlu0 %v22
  %v24 = vpop.xlane.xlu0 %23
  %v25 = vsel %vm21, %v18, 0.0
  %26 = vadd.xlane.f32.xlu0 %v25
  %v27 = vpop.xlane.xlu0 %26
  %v28 = vsel %vm21, %v19, 0.0
  %29 = vadd.xlane.f32.xlu0 %v28
  %v30 = vpop.xlane.xlu0 %29
  %v31 = vsel %vm21, %v20, 0.0
  %32 = vadd.xlane.f32.xlu0 %v31
  %v33 = vpop.xlane.xlu0 %32
  %v34 = vmax.f32 %v24, 1e-24
  %v35 = vmax.f32 %v27, 1e-24
  %v36 = vmax.f32 %v30, 1e-24
  %v37 = vmax.f32 %v33, 1e-24
  %v38 = vrsqrt.pop %v34
  %v39 = vrsqrt.pop %v35
  %v40 = vrsqrt.pop %v36
  %v41 = vrsqrt.pop %v37
  %v42 = vmul.f32 %v13, %v38
  %v43 = vmul.f32 %v14, %v39
  %v44 = vmul.f32 %v15, %v40
  %v45 = vmul.f32 %v16, %v41
  %46 = vst.msk [vmem:[%s2] sm:$0xff] %vm21, %v42
  %47 = vst.msk [vmem:[%s2 + $0x8] sm:$0xff] %vm21, %v43
  %48 = vst.msk [vmem:[%s2 + $0x10] sm:$0xff] %vm21, %v44
  %49 = vst.msk [vmem:[%s2 + $0x18] sm:$0xff] %vm21, %v45
  %v50 = vld [vmem:[%s1] sm:$0xff]
  %v51 = vld [vmem:[%s1 + $0x8] sm:$0xff]
  %v52 = vld [vmem:[%s1 + $0x10] sm:$0xff]
  %v53 = vld [vmem:[%s1 + $0x18] sm:$0xff]
  %v54 = vadd.f32 %v50, %v42
  %v55 = vadd.f32 %v51, %v43
  %v56 = vadd.f32 %v52, %v44
  %v57 = vadd.f32 %v53, %v45
  %58 = vst.msk [vmem:[%s3] sm:$0xff] %vm21, %v54
  %59 = vst.msk [vmem:[%s3 + $0x8] sm:$0xff] %vm21, %v55
  %60 = vst.msk [vmem:[%s3 + $0x10] sm:$0xff] %vm21, %v56
  %61 = vst.msk [vmem:[%s3 + $0x18] sm:$0xff] %vm21, %v57
  // Predicated region
  $region10: #{graph_conv_forward.15} parent=0 // pred_check
    _
  $region11: #{graph_conv_forward.15} parent=0 // pred_check_branch
    %63 = sbr.rel (0) target = $region13
  $region12: #{graph_conv_forward.15} parent=0 // pred_region
    _
  $region13: #{graph_conv_forward.15} parent=0 // pred_fallthru
    _
  // Predicated region
  $region14: #{graph_conv_forward.15} parent=0 // pred_check
    _
  $region15: #{graph_conv_forward.15} parent=0 // pred_check_branch
    %65 = sbr.rel (0) target = $region17
  $region16: #{graph_conv_forward.15} parent=0 // pred_region
    _
  $region17: #{graph_conv_forward.15} parent=0 // pred_fallthru
    _
  // Predicated region
  $region18: #{graph_conv_forward.15} parent=0 // pred_check
    _
  $region19: #{graph_conv_forward.15} parent=0 // pred_check_branch
    %67 = sbr.rel (0) target = $region21
  $region20: #{graph_conv_forward.15} parent=0 // pred_region
    _
  $region21: #{graph_conv_forward.15} parent=0 // pred_fallthru
    _
  // Predicated region
  $region22: #{graph_conv_forward.15} parent=0 // pred_check
    _
  $region23: #{graph_conv_forward.15} parent=0 // pred_check_branch
    %69 = sbr.rel (0) target = $region25
  $region24: #{graph_conv_forward.15} parent=0 // pred_region
    _
  $region25: #{graph_conv_forward.15} parent=0 // pred_fallthru
    _

// kernel: graph_conv_forward.17
$region0: #{graph_conv_forward.17}
  #allocation0 [shape = 'u32[]', space=smem, size = 0x4, offset = 0x4, fixed_abs, tag = 'smem constant byte address 0x4 - core index']
  #allocation1 [shape = 'u32[144,128]{1,0:T(1,128)}', space=vmem, size = 0x12000, scoped, tag = 'internal scratch']
  %s0 = inlined_call_operand.vmem [shape: s8[8,32], index: 0, kind: input, shape index: {}]
  %s1 = inlined_call_operand.vmem [shape: bf16[32,16], index: 1, kind: input, shape index: {}]
  %s2 = inlined_call_operand.vmem [shape: f32[8,16], index: 2, kind: input, shape index: {}]
  %s3 = inlined_call_operand.vmem [shape: f32[4,16], index: 3, kind: input, shape index: {}]
  %s4 = inlined_call_operand.vmem [shape: f32[8,16], index: 4, kind: input, shape index: {}]
  %s5 = inlined_call_operand.hbm [shape: f32[8,16], index: 5, kind: output, shape index: {0}]
  %s6 = inlined_call_operand.hbm [shape: f32[8,16], index: 6, kind: output, shape index: {1}]
  %7 = xla_tuple %s5, %s6
  %s8 = sld [smem:[#allocation0]]
  $region38: #{graph_conv_forward.17} parent=0
    _
  %s10 = ssub.s32 1, %s8
  %s11 = scalar_select 0, %s10, %s8
  $region1: #{graph_conv_forward.17} parent=0
    #allocation2 [shape = 'u8[4096]{0}', space=vmem, size = 0x1000, scoped, tag = 'output window, operand 0, single buffered']
    #allocation3 [shape = 's32[1]{0}', space=sflag, size = 0x4, scoped, tag = 'scoped memory for graph_conv_forward.17']
    #allocation4 [shape = 'u8[4096]{0}', space=vmem, size = 0x1000, scoped, tag = 'output window, operand 1, single buffered']
    #allocation5 [shape = 's32[1]{0}', space=sflag, size = 0x4, scoped, tag = 'scoped memory for graph_conv_forward.17']
    %12 = vsyncpa [#allocation3], 0
    %13 = vsyncpa [#allocation5], 0
    // Predicated region
    $region2: #{graph_conv_forward.17} parent=1 // pred_check
      _
    $region3: #{graph_conv_forward.17} parent=1 // pred_check_branch
      %15 = sbr.rel (0) target = $region5
    $region4: #{graph_conv_forward.17} parent=1 // pred_region
      _
    $region5: #{graph_conv_forward.17} parent=1 // pred_fallthru
      _
    // Predicated region
    $region6: #{graph_conv_forward.17} parent=1 // pred_check
      _
    $region7: #{graph_conv_forward.17} parent=1 // pred_check_branch
      %17 = sbr.rel (0) target = $region9
    $region8: #{graph_conv_forward.17} parent=1 // pred_region
      _
    $region9: #{graph_conv_forward.17} parent=1 // pred_fallthru
      _
    // Predicated region
    $region10: #{graph_conv_forward.17} parent=1 // pred_check
      _
    $region11: #{graph_conv_forward.17} parent=1 // pred_check_branch
      %19 = sbr.rel (0) target = $region13
    $region12: #{graph_conv_forward.17} parent=1 // pred_region
      _
    $region13: #{graph_conv_forward.17} parent=1 // pred_fallthru
      _
    // Predicated region
    $region14: #{graph_conv_forward.17} parent=1 // pred_check
      _
    $region15: #{graph_conv_forward.17} parent=1 // pred_check_branch
      %21 = sbr.rel (0) target = $region17
    $region16: #{graph_conv_forward.17} parent=1 // pred_region
      _
    $region17: #{graph_conv_forward.17} parent=1 // pred_fallthru
      _
    // Predicated region
    $region18: #{graph_conv_forward.17} parent=1 // pred_check
      _
    $region19: #{graph_conv_forward.17} parent=1 // pred_check_branch
      %23 = sbr.rel (0) target = $region21
    $region20: #{graph_conv_forward.17} parent=1 // pred_region
      _
    $region21: #{graph_conv_forward.17} parent=1 // pred_fallthru
      _
    %v25 = vld [vmem:[%s0] sm:$0x3]
    %v26 = vunpack.c.l.s8.bf16 %v25
    %v27 = vld [vmem:[%s1] sm:$0xf]
    %v28 = vld [vmem:[%s1 + $0x4] sm:$0xf]
    %v29 = vld [vmem:[%s1 + $0x8] sm:$0xf]
    %v30 = vld [vmem:[%s1 + $0xc] sm:$0xf]
    %v35 = vunpack.c.l.b16 %v27
    %v36 = vunpack.c.l.b16 %v28
    %v37 = vunpack.c.l.b16 %v29
    %v38 = vunpack.c.l.b16 %v30
    %v39 = vpack.c.b16 %v36, %v35
    %v40 = vpack.c.b16 %v38, %v37
    %vm43 = vcmask 261120
    %v45 = vsel %vm43, %v26, 0
    %47 = vmatprep.subr.bf16.mxu0 0
    %48 = vmatpush1.bf16.msra.mxu0 0
    %49 = vmatprep.subr.bf16.mxu0 0
    %50 = vmatpush1.bf16.msra.mxu0 0
    %51 = vmatprep.subr.bf16.mxu0 0
    %52 = vmatpush1.bf16.msra.mxu0 0
    %53 = vmatprep.subr.bf16.mxu0 0
    %54 = vmatpush1.bf16.msra.mxu0 0
    %55 = vmatprep.subr.bf16.mxu0 0
    %56 = vmatpush1.bf16.msra.mxu0 0
    %57 = vmatprep.subr.bf16.mxu0 0
    %58 = vmatpush1.bf16.msra.mxu0 0
    %59 = vmatprep.subr.bf16.mxu0 0
    %60 = vmatpush1.bf16.msra.mxu0 %v40
    %61 = vmatprep.subr.bf16.mxu0 0
    %62 = vmatpush1.bf16.msra.mxu0 %v39
    %63 = vmatprep.subr.bf16.mxu0 0
    %64 = vmatpush2.bf16.msra.mxu0 0
    %65 = vmatprep.subr.bf16.mxu0 0
    %66 = vmatpush2.bf16.msra.mxu0 0
    %67 = vmatprep.subr.bf16.mxu0 0
    %68 = vmatpush2.bf16.msra.mxu0 0
    %69 = vmatprep.subr.bf16.mxu0 0
    %70 = vmatpush2.bf16.msra.mxu0 0
    %71 = vmatprep.subr.bf16.mxu0 0
    %72 = vmatpush2.bf16.msra.mxu0 0
    %73 = vmatprep.subr.bf16.mxu0 0
    %74 = vmatpush2.bf16.msra.mxu0 0
    %75 = vmatprep.subr.bf16.mxu0 0
    %76 = vmatpush2.bf16.msra.mxu0 0
    %77 = vmatprep.subr.bf16.mxu0 0
    %78 = vmatpush2.bf16.msra.mxu0 0
    %79 = vmatprep.mubr.bf16.mxu0 0
    %80 = vmatmul.mubr.bf16.gmra.mxu0 %v45
    %v81 = vpop.f32.mrf.mxu0
    %v82 = vadd.f32 0.0, %v81
    %v83 = vpop.f32.mrf.mxu0
    %v84 = vpop.f32.mrf.mxu0
    %v85 = vpop.f32.mrf.mxu0
    %86 = vdwg.mxu0
    %v87 = vld [vmem:[%s2] sm:$0xff]
    %v88 = vld [vmem:[%s3] sm:$0xf]
    %vm89 = vcmask 130048
    %v91 = vsel %vm89, %v87, 0
    %v94 = vsel %vm89, %v88, 0
    %96 = vmatprep.subr.mxu0 0.0
    %97 = vmatpush1.xpose.msra.mxu0 0.0
    %98 = vmatprep.subr.mxu0 0.0
    %99 = vmatpush1.xpose.msra.mxu0 0.0
    %100 = vmatprep.subr.mxu0 0.0
    %101 = vmatpush1.xpose.msra.mxu0 0.0
    %102 = vmatprep.subr.mxu0 0.0
    %103 = vmatpush1.xpose.msra.mxu0 0.0
    %104 = vmatprep.subr.mxu0 0.0
    %105 = vmatpush1.xpose.msra.mxu0 0.0
    %106 = vmatprep.subr.mxu0 0.0
    %107 = vmatpush1.xpose.msra.mxu0 0.0
    %108 = vmatprep.subr.mxu0 0.0
    %109 = vmatpush1.xpose.msra.mxu0 0.0
    %110 = vmatprep.subr.mxu0 0.0
    %111 = vmatpush1.xpose.msra.mxu0 0.0
    %112 = vmatprep.subr.mxu0 0.0
    %113 = vmatpush1.xpose.msra.mxu0 0.0
    %114 = vmatprep.subr.mxu0 0.0
    %115 = vmatpush1.xpose.msra.mxu0 0.0
    %116 = vmatprep.subr.mxu0 0.0
    %117 = vmatpush1.xpose.msra.mxu0 0.0
    %118 = vmatprep.subr.mxu0 0.0
    %119 = vmatpush1.xpose.msra.mxu0 0.0
    %120 = vmatprep.subr.mxu0 0.0
    %121 = vmatpush1.xpose.msra.mxu0 0.0
    %122 = vmatprep.subr.mxu0 0.0
    %123 = vmatpush1.xpose.msra.mxu0 0.0
    %124 = vmatprep.subr.mxu0 0.0
    %125 = vmatpush1.xpose.msra.mxu0 0.0
    %126 = vmatprep.subr.mxu0 0.0
    %127 = vmatpush1.xpose.msra.mxu0 %v94
    %128 = vmatprep.subr.mxu0 0.0
    %129 = vmatpush2.xpose.msra.mxu0 0.0
    %130 = vmatprep.subr.mxu0 0.0
    %131 = vmatpush2.xpose.msra.mxu0 0.0
    %132 = vmatprep.subr.mxu0 0.0
    %133 = vmatpush2.xpose.msra.mxu0 0.0
    %134 = vmatprep.subr.mxu0 0.0
    %135 = vmatpush2.xpose.msra.mxu0 0.0
    %136 = vmatprep.subr.mxu0 0.0
    %137 = vmatpush2.xpose.msra.mxu0 0.0
    %138 = vmatprep.subr.mxu0 0.0
    %139 = vmatpush2.xpose.msra.mxu0 0.0
    %140 = vmatprep.subr.mxu0 0.0
    %141 = vmatpush2.xpose.msra.mxu0 0.0
    %142 = vmatprep.subr.mxu0 0.0
    %143 = vmatpush2.xpose.msra.mxu0 0.0
    %144 = vmatprep.subr.mxu0 0.0
    %145 = vmatpush2.xpose.msra.mxu0 0.0
    %146 = vmatprep.subr.mxu0 0.0
    %147 = vmatpush2.xpose.msra.mxu0 0.0
    %148 = vmatprep.subr.mxu0 0.0
    %149 = vmatpush2.xpose.msra.mxu0 0.0
    %150 = vmatprep.subr.mxu0 0.0
    %151 = vmatpush2.xpose.msra.mxu0 0.0
    %152 = vmatprep.subr.mxu0 0.0
    %153 = vmatpush2.xpose.msra.mxu0 0.0
    %154 = vmatprep.subr.mxu0 0.0
    %155 = vmatpush2.xpose.msra.mxu0 0.0
    %156 = vmatprep.subr.mxu0 0.0
    %157 = vmatpush2.xpose.msra.mxu0 0.0
    %158 = vmatprep.subr.mxu0 0.0
    %159 = vmatpush2.xpose.msra.mxu0 0.0
    %160 = vmatprep.mubr.f32.mxu0 0.0
    %161 = vmatmul.mubr.f32.gmra.mxu0 %v91
    %v162 = vpop.f32.mrf.mxu0
    %v163 = vadd.f32 0.0, %v162
    %v164 = vpop.f32.mrf.mxu0
    %165 = vdwg.mxu0
    %vm166 = vcmask 31744
    %v167 = vsel %vm166, %v163, -inf
    %168 = vmax.xlane.f32.xlu0 %v167
    %v169 = vpop.xlane.xlu0 %168
    %v170 = vsub.f32 %v163, %v169
    %v171 = vmul.f32 %v170, 1.442695
    %v172 = vpow.pop %v171
    %v173 = vsel %vm166, %v172, 0.0
    %174 = vadd.xlane.f32.xlu0 %v173
    %v175 = vpop.xlane.xlu0 %174
    %v176 = vrcp.pop %v175
    %v177 = vmul.f32 %v172, %v176
    %v179 = vsel %vm166, %v177, 0
    %vm181 = vcmask 1043456
    %v182 = vsel %vm181, %v88, 0
    %184 = vmatprep.subr.mxu0 0.0
    %185 = vmatpush1.msra.mxu0 0.0
    %186 = vmatprep.subr.mxu0 0.0
    %187 = vmatpush1.msra.mxu0 0.0
    %188 = vmatprep.subr.mxu0 0.0
    %189 = vmatpush1.msra.mxu0 0.0
    %190 = vmatprep.subr.mxu0 0.0
    %191 = vmatpush1.msra.mxu0 0.0
    %192 = vmatprep.subr.mxu0 0.0
    %193 = vmatpush1.msra.mxu0 0.0
    %194 = vmatprep.subr.mxu0 0.0
    %195 = vmatpush1.msra.mxu0 0.0
    %196 = vmatprep.subr.mxu0 0.0
    %197 = vmatpush1.msra.mxu0 0.0
    %198 = vmatprep.subr.mxu0 0.0
    %199 = vmatpush1.msra.mxu0 0.0
    %200 = vmatprep.subr.mxu0 0.0
    %201 = vmatpush1.msra.mxu0 0.0
    %202 = vmatprep.subr.mxu0 0.0
    %203 = vmatpush1.msra.mxu0 0.0
    %204 = vmatprep.subr.mxu0 0.0
    %205 = vmatpush1.msra.mxu0 0.0
    %206 = vmatprep.subr.mxu0 0.0
    %207 = vmatpush1.msra.mxu0 0.0
    %208 = vmatprep.subr.mxu0 0.0
    %209 = vmatpush1.msra.mxu0 0.0
    %210 = vmatprep.subr.mxu0 0.0
    %211 = vmatpush1.msra.mxu0 0.0
    %212 = vmatprep.subr.mxu0 0.0
    %213 = vmatpush1.msra.mxu0 0.0
    %214 = vmatprep.subr.mxu0 0.0
    %215 = vmatpush1.msra.mxu0 %v182
    %216 = vmatprep.subr.mxu0 0.0
    %217 = vmatpush2.msra.mxu0 0.0
    %218 = vmatprep.subr.mxu0 0.0
    %219 = vmatpush2.msra.mxu0 0.0
    %220 = vmatprep.subr.mxu0 0.0
    %221 = vmatpush2.msra.mxu0 0.0
    %222 = vmatprep.subr.mxu0 0.0
    %223 = vmatpush2.msra.mxu0 0.0
    %224 = vmatprep.subr.mxu0 0.0
    %225 = vmatpush2.msra.mxu0 0.0
    %226 = vmatprep.subr.mxu0 0.0
    %227 = vmatpush2.msra.mxu0 0.0
    %228 = vmatprep.subr.mxu0 0.0
    %229 = vmatpush2.msra.mxu0 0.0
    %230 = vmatprep.subr.mxu0 0.0
    %231 = vmatpush2.msra.mxu0 0.0
    %232 = vmatprep.subr.mxu0 0.0
    %233 = vmatpush2.msra.mxu0 0.0
    %234 = vmatprep.subr.mxu0 0.0
    %235 = vmatpush2.msra.mxu0 0.0
    %236 = vmatprep.subr.mxu0 0.0
    %237 = vmatpush2.msra.mxu0 0.0
    %238 = vmatprep.subr.mxu0 0.0
    %239 = vmatpush2.msra.mxu0 0.0
    %240 = vmatprep.subr.mxu0 0.0
    %241 = vmatpush2.msra.mxu0 0.0
    %242 = vmatprep.subr.mxu0 0.0
    %243 = vmatpush2.msra.mxu0 0.0
    %244 = vmatprep.subr.mxu0 0.0
    %245 = vmatpush2.msra.mxu0 0.0
    %246 = vmatprep.subr.mxu0 0.0
    %247 = vmatpush2.msra.mxu0 0.0
    %248 = vmatprep.mubr.f32.mxu0 0.0
    %249 = vmatmul.mubr.f32.gmra.mxu0 %v179
    %v250 = vpop.f32.mrf.mxu0
    %v251 = vadd.f32 0.0, %v250
    %v252 = vpop.f32.mrf.mxu0
    %253 = vdwg.mxu0
    %v254 = vmul.f32 %v251, %v82
    %v255 = vadd.f32 %v82, %v254
    %v256 = vmul.f32 %v255, %v255
    %v257 = vsel %vm89, %v256, 0.0
    %258 = vadd.xlane.f32.xlu0 %v257
    %v259 = vpop.xlane.xlu0 %258
    %v260 = vmax.f32 %v259, 1e-24
    %v261 = vrsqrt.pop %v260
    %v262 = vmul.f32 %v255, %v261
    %263 = vst.msk [vmem:[#allocation2] sm:$0xff] %vm89, %v262
    %v264 = vld [vmem:[%s4] sm:$0xff]
    %v265 = vadd.f32 %v264, %v262
    %266 = vst.msk [vmem:[#allocation4] sm:$0xff] %vm89, %v265
    // Predicated region
    $region22: #{graph_conv_forward.17} parent=1 // pred_check
      _
    $region23: #{graph_conv_forward.17} parent=1 // pred_check_branch
      %268 = sbr.rel (0) target = $region25
    $region24: #{graph_conv_forward.17} parent=1 // pred_region
      %s270 = ssub.s32 128, 128
      %271 = vsyncadd [#allocation3], %s270
      %s273 = sshll.u32 [#allocation2], 4
      %s274 = int_to_ptr.vmem [resolvable:$true] %s273
      %276 = dma.vmem_to_hbm [thread:$0]  %s274, 128, %s5, [#allocation3]
    $region25: #{graph_conv_forward.17} parent=1 // pred_fallthru
      _
    // Predicated region
    $region26: #{graph_conv_forward.17} parent=1 // pred_check
      _
    $region27: #{graph_conv_forward.17} parent=1 // pred_check_branch
      %278 = sbr.rel (0) target = $region29
    $region28: #{graph_conv_forward.17} parent=1 // pred_region
      %s280 = ssub.s32 128, 128
      %281 = vsyncadd [#allocation5], %s280
      %s283 = sshll.u32 [#allocation4], 4
      %s284 = int_to_ptr.vmem [resolvable:$true] %s283
      %286 = dma.vmem_to_hbm [thread:$0]  %s284, 128, %s6, [#allocation5]
    $region29: #{graph_conv_forward.17} parent=1 // pred_fallthru
      _
    // Predicated region
    $region30: #{graph_conv_forward.17} parent=1 // pred_check
      _
    $region31: #{graph_conv_forward.17} parent=1 // pred_check_branch
      %288 = sbr.rel (0) target = $region33
    $region32: #{graph_conv_forward.17} parent=1 // pred_region
      %289 = dma.done [#allocation3], 128
    $region33: #{graph_conv_forward.17} parent=1 // pred_fallthru
      _
    // Predicated region
    $region34: #{graph_conv_forward.17} parent=1 // pred_check
      _
    $region35: #{graph_conv_forward.17} parent=1 // pred_check_branch
      %291 = sbr.rel (0) target = $region37
    $region36: #{graph_conv_forward.17} parent=1 // pred_region
      %292 = dma.done [#allocation5], 128
    $region37: #{graph_conv_forward.17} parent=1 // pred_fallthru
      _
    %293 = vsyncpa [#allocation3], 1
    %294 = vsyncpa [#allocation5], 1

// kernel: graph_conv_forward.18
$region0: #{graph_conv_forward.18}
  #allocation0 [shape = 'u32[]', space=smem, size = 0x4, offset = 0x4, fixed_abs, tag = 'smem constant byte address 0x4 - core index']
  #allocation1 [shape = 'u32[144,128]{1,0:T(1,128)}', space=vmem, size = 0x12000, scoped, tag = 'internal scratch']
  %s0 = inlined_call_operand.vmem [shape: f32[32,16], index: 0, kind: input, shape index: {}]
  %s1 = inlined_call_operand.vmem [shape: f32[32,16], index: 1, kind: input, shape index: {}]
  %s2 = inlined_call_operand.hbm [shape: f32[32,16], index: 2, kind: output, shape index: {0}]
  %s3 = inlined_call_operand.vmem [shape: f32[32,16], index: 3, kind: output, shape index: {1}]
  %4 = xla_tuple %s2, %s3
  %s5 = sld [smem:[#allocation0]]
  $region26: #{graph_conv_forward.18} parent=0
    _
  %s7 = ssub.s32 1, %s5
  %s8 = scalar_select 0, %s7, %s5
  $region1: #{graph_conv_forward.18} parent=0
    #allocation2 [shape = 'u8[16384]{0}', space=vmem, size = 0x4000, scoped, tag = 'output window, operand 0, single buffered']
    #allocation3 [shape = 's32[1]{0}', space=sflag, size = 0x4, scoped, tag = 'scoped memory for graph_conv_forward.18']
    %9 = vsyncpa [#allocation3], 0
    // Predicated region
    $region2: #{graph_conv_forward.18} parent=1 // pred_check
      _
    $region3: #{graph_conv_forward.18} parent=1 // pred_check_branch
      %11 = sbr.rel (0) target = $region5
    $region4: #{graph_conv_forward.18} parent=1 // pred_region
      _
    $region5: #{graph_conv_forward.18} parent=1 // pred_fallthru
      _
    // Predicated region
    $region6: #{graph_conv_forward.18} parent=1 // pred_check
      _
    $region7: #{graph_conv_forward.18} parent=1 // pred_check_branch
      %13 = sbr.rel (0) target = $region9
    $region8: #{graph_conv_forward.18} parent=1 // pred_region
      _
    $region9: #{graph_conv_forward.18} parent=1 // pred_fallthru
      _
    %v14 = vld [vmem:[%s0] sm:$0xff]
    %v15 = vld [vmem:[%s0 + $0x8] sm:$0xff]
    %v16 = vld [vmem:[%s0 + $0x10] sm:$0xff]
    %v17 = vld [vmem:[%s0 + $0x18] sm:$0xff]
    %v18 = vmul.f32 %v14, %v14
    %v19 = vmul.f32 %v15, %v15
    %v20 = vmul.f32 %v16, %v16
    %v21 = vmul.f32 %v17, %v17
    %vm22 = vcmask 130048
    %v23 = vsel %vm22, %v18, 0.0
    %24 = vadd.xlane.f32.xlu0 %v23
    %v25 = vpop.xlane.xlu0 %24
    %v26 = vsel %vm22, %v19, 0.0
    %27 = vadd.xlane.f32.xlu0 %v26
    %v28 = vpop.xlane.xlu0 %27
    %v29 = vsel %vm22, %v20, 0.0
    %30 = vadd.xlane.f32.xlu0 %v29
    %v31 = vpop.xlane.xlu0 %30
    %v32 = vsel %vm22, %v21, 0.0
    %33 = vadd.xlane.f32.xlu0 %v32
    %v34 = vpop.xlane.xlu0 %33
    %v35 = vmax.f32 %v25, 1e-24
    %v36 = vmax.f32 %v28, 1e-24
    %v37 = vmax.f32 %v31, 1e-24
    %v38 = vmax.f32 %v34, 1e-24
    %v39 = vrsqrt.pop %v35
    %v40 = vrsqrt.pop %v36
    %v41 = vrsqrt.pop %v37
    %v42 = vrsqrt.pop %v38
    %v43 = vmul.f32 %v14, %v39
    %v44 = vmul.f32 %v15, %v40
    %v45 = vmul.f32 %v16, %v41
    %v46 = vmul.f32 %v17, %v42
    %47 = vst.msk [vmem:[#allocation2] sm:$0xff] %vm22, %v43
    %48 = vst.msk [vmem:[#allocation2 + $0x8] sm:$0xff] %vm22, %v44
    %49 = vst.msk [vmem:[#allocation2 + $0x10] sm:$0xff] %vm22, %v45
    %50 = vst.msk [vmem:[#allocation2 + $0x18] sm:$0xff] %vm22, %v46
    %v51 = vld [vmem:[%s1] sm:$0xff]
    %v52 = vld [vmem:[%s1 + $0x8] sm:$0xff]
    %v53 = vld [vmem:[%s1 + $0x10] sm:$0xff]
    %v54 = vld [vmem:[%s1 + $0x18] sm:$0xff]
    %v55 = vadd.f32 %v51, %v43
    %v56 = vadd.f32 %v52, %v44
    %v57 = vadd.f32 %v53, %v45
    %v58 = vadd.f32 %v54, %v46
    %59 = vst.msk [vmem:[%s3] sm:$0xff] %vm22, %v55
    %60 = vst.msk [vmem:[%s3 + $0x8] sm:$0xff] %vm22, %v56
    %61 = vst.msk [vmem:[%s3 + $0x10] sm:$0xff] %vm22, %v57
    %62 = vst.msk [vmem:[%s3 + $0x18] sm:$0xff] %vm22, %v58
    // Predicated region
    $region10: #{graph_conv_forward.18} parent=1 // pred_check
      _
    $region11: #{graph_conv_forward.18} parent=1 // pred_check_branch
      %64 = sbr.rel (0) target = $region13
    $region12: #{graph_conv_forward.18} parent=1 // pred_region
      %s66 = ssub.s32 512, 512
      %67 = vsyncadd [#allocation3], %s66
      %s68 = sshll.u32 [#allocation2], 4
      %s69 = int_to_ptr.vmem [resolvable:$true] %s68
      %74 = dma.vmem_to_hbm [thread:$0]  %s69, 512, %s2, [#allocation3], 128, 128, 8
    $region13: #{graph_conv_forward.18} parent=1 // pred_fallthru
      _
    // Predicated region
    $region14: #{graph_conv_forward.18} parent=1 // pred_check
      _
    $region15: #{graph_conv_forward.18} parent=1 // pred_check_branch
      %76 = sbr.rel (0) target = $region17
    $region16: #{graph_conv_forward.18} parent=1 // pred_region
      _
    $region17: #{graph_conv_forward.18} parent=1 // pred_fallthru
      _
    // Predicated region
    $region18: #{graph_conv_forward.18} parent=1 // pred_check
      _
    $region19: #{graph_conv_forward.18} parent=1 // pred_check_branch
      %78 = sbr.rel (0) target = $region21
    $region20: #{graph_conv_forward.18} parent=1 // pred_region
      %79 = dma.done [#allocation3], 512
    $region21: #{graph_conv_forward.18} parent=1 // pred_fallthru
      _
    // Predicated region
    $region22: #{graph_conv_forward.18} parent=1 // pred_check
      _
    $region23: #{graph_conv_forward.18} parent=1 // pred_check_branch
      %81 = sbr.rel (0) target = $region25
    $region24: #{graph_conv_forward.18} parent=1 // pred_region
      _
    $region25: #{graph_conv_forward.18} parent=1 // pred_fallthru
      _
    %82 = vsyncpa [#allocation3], 1

// kernel: graph_conv_forward.21
$region0: #{graph_conv_forward.21}
  #allocation0 [shape = 'u32[]', space=smem, size = 0x4, offset = 0x4, fixed_abs, tag = 'smem constant byte address 0x4 - core index']
  #allocation1 [shape = 'u32[144,128]{1,0:T(1,128)}', space=vmem, size = 0x12000, scoped, tag = 'internal scratch']
  %s0 = inlined_call_operand.vmem [shape: bf16[32,32], index: 0, kind: input, shape index: {}]
  %s1 = inlined_call_operand.vmem [shape: f32[32,1], index: 1, kind: input, shape index: {}]
  %s2 = inlined_call_operand.vmem [shape: f32[32,1], index: 2, kind: input, shape index: {}]
  %s3 = inlined_call_operand.vmem [shape: f32[1,32], index: 3, kind: input, shape index: {}]
  %s4 = inlined_call_operand.vmem [shape: bf16[32,32], index: 4, kind: input, shape index: {}]
  %s5 = inlined_call_operand.vmem [shape: f32[32,1], index: 5, kind: input, shape index: {}]
  %s6 = inlined_call_operand.vmem [shape: f32[32,1], index: 6, kind: input, shape index: {}]
  %s7 = inlined_call_operand.vmem [shape: f32[1,32], index: 7, kind: input, shape index: {}]
  %s8 = inlined_call_operand.hbm [shape: f32[32,32], index: 8, kind: output, shape index: {}]
  %s9 = sld [smem:[#allocation0]]
  $region42: #{graph_conv_forward.21} parent=0
    _
  %s11 = ssub.s32 1, %s9
  %s12 = scalar_select 0, %s11, %s9
  $region1: #{graph_conv_forward.21} parent=0
    #allocation2 [shape = 'u8[16384]{0}', space=vmem, size = 0x4000, scoped, tag = 'output window, operand 0, single buffered']
    #allocation3 [shape = 's32[1]{0}', space=sflag, size = 0x4, scoped, tag = 'scoped memory for graph_conv_forward.21']
    %13 = vsyncpa [#allocation3], 0
    // Predicated region
    $region2: #{graph_conv_forward.21} parent=1 // pred_check
      _
    $region3: #{graph_conv_forward.21} parent=1 // pred_check_branch
      %15 = sbr.rel (0) target = $region5
    $region4: #{graph_conv_forward.21} parent=1 // pred_region
      _
    $region5: #{graph_conv_forward.21} parent=1 // pred_fallthru
      _
    // Predicated region
    $region6: #{graph_conv_forward.21} parent=1 // pred_check
      _
    $region7: #{graph_conv_forward.21} parent=1 // pred_check_branch
      %17 = sbr.rel (0) target = $region9
    $region8: #{graph_conv_forward.21} parent=1 // pred_region
      _
    $region9: #{graph_conv_forward.21} parent=1 // pred_fallthru
      _
    // Predicated region
    $region10: #{graph_conv_forward.21} parent=1 // pred_check
      _
    $region11: #{graph_conv_forward.21} parent=1 // pred_check_branch
      %19 = sbr.rel (0) target = $region13
    $region12: #{graph_conv_forward.21} parent=1 // pred_region
      _
    $region13: #{graph_conv_forward.21} parent=1 // pred_fallthru
      _
    // Predicated region
    $region14: #{graph_conv_forward.21} parent=1 // pred_check
      _
    $region15: #{graph_conv_forward.21} parent=1 // pred_check_branch
      %21 = sbr.rel (0) target = $region17
    $region16: #{graph_conv_forward.21} parent=1 // pred_region
      _
    $region17: #{graph_conv_forward.21} parent=1 // pred_fallthru
      _
    // Predicated region
    $region18: #{graph_conv_forward.21} parent=1 // pred_check
      _
    $region19: #{graph_conv_forward.21} parent=1 // pred_check_branch
      %23 = sbr.rel (0) target = $region21
    $region20: #{graph_conv_forward.21} parent=1 // pred_region
      _
    $region21: #{graph_conv_forward.21} parent=1 // pred_fallthru
      _
    // Predicated region
    $region22: #{graph_conv_forward.21} parent=1 // pred_check
      _
    $region23: #{graph_conv_forward.21} parent=1 // pred_check_branch
      %25 = sbr.rel (0) target = $region25
    $region24: #{graph_conv_forward.21} parent=1 // pred_region
      _
    $region25: #{graph_conv_forward.21} parent=1 // pred_fallthru
      _
    // Predicated region
    $region26: #{graph_conv_forward.21} parent=1 // pred_check
      _
    $region27: #{graph_conv_forward.21} parent=1 // pred_check_branch
      %27 = sbr.rel (0) target = $region29
    $region28: #{graph_conv_forward.21} parent=1 // pred_region
      _
    $region29: #{graph_conv_forward.21} parent=1 // pred_fallthru
      _
    // Predicated region
    $region30: #{graph_conv_forward.21} parent=1 // pred_check
      _
    $region31: #{graph_conv_forward.21} parent=1 // pred_check_branch
      %29 = sbr.rel (0) target = $region33
    $region32: #{graph_conv_forward.21} parent=1 // pred_region
      _
    $region33: #{graph_conv_forward.21} parent=1 // pred_fallthru
      _
    %v30 = vld [vmem:[%s0] sm:$0xf]
    %v31 = vld [vmem:[%s0 + $0x4] sm:$0xf]
    %v32 = vld [vmem:[%s0 + $0x8] sm:$0xf]
    %v33 = vld [vmem:[%s0 + $0xc] sm:$0xf]
    %v34 = vunpack.c.l.bf16 %v30
    %v35 = vunpack.c.l.bf16 %v31
    %v36 = vunpack.c.l.bf16 %v32
    %v37 = vunpack.c.l.bf16 %v33
    %v38 = vld [vmem:[%s1] sm:$0xff]
    %v39 = vld [vmem:[%s1 + $0x8] sm:$0xff]
    %v40 = vld [vmem:[%s1 + $0x10] sm:$0xff]
    %v41 = vld [vmem:[%s1 + $0x18] sm:$0xff]
    %43 = vset.pattern.permute.xlu0 0
    %44 = vperm.xlu0 %43, %v38
    %v45 = vpop.permute.xlu0 %44
    %48 = vset.pattern.permute.xlu0 0
    %49 = vperm.xlu0 %48, %v39
    %v50 = vpop.permute.xlu0 %49
    %53 = vset.pattern.permute.xlu0 0
    %54 = vperm.xlu0 %53, %v40
    %v55 = vpop.permute.xlu0 %54
    %58 = vset.pattern.permute.xlu0 0
    %59 = vperm.xlu0 %58, %v41
    %v60 = vpop.permute.xlu0 %59
    %vm62 = vcmp.ge.f32.partialorder %v34, %v45
    %vm63 = vcmp.ge.f32.partialorder %v35, %v50
    %vm64 = vcmp.ge.f32.partialorder %v36, %v55
    %vm65 = vcmp.ge.f32.partialorder %v37, %v60
    %v66 = vsel %vm62, %v34, 0.0
    %v67 = vsel %vm63, %v35, 0.0
    %v68 = vsel %vm64, %v36, 0.0
    %v69 = vsel %vm65, %v37, 0.0
    %v70 = vld [vmem:[%s2] sm:$0xff]
    %v71 = vld [vmem:[%s2 + $0x8] sm:$0xff]
    %v72 = vld [vmem:[%s2 + $0x10] sm:$0xff]
    %v73 = vld [vmem:[%s2 + $0x18] sm:$0xff]
    %75 = vset.pattern.permute.xlu0 0
    %76 = vperm.xlu0 %75, %v70
    %v77 = vpop.permute.xlu0 %76
    %80 = vset.pattern.permute.xlu0 0
    %81 = vperm.xlu0 %80, %v71
    %v82 = vpop.permute.xlu0 %81
    %85 = vset.pattern.permute.xlu0 0
    %86 = vperm.xlu0 %85, %v72
    %v87 = vpop.permute.xlu0 %86
    %90 = vset.pattern.permute.xlu0 0
    %91 = vperm.xlu0 %90, %v73
    %v92 = vpop.permute.xlu0 %91
    %v94 = vmul.f32 %v66, %v77
    %v95 = vmul.f32 %v67, %v82
    %v96 = vmul.f32 %v68, %v87
    %v97 = vmul.f32 %v69, %v92
    %v98 = vld [vmem:[%s3] sm:$0x1]
    %v100 = vlaneseq
    %v101 = vshrl.u32 %v100, 7
    %v102 = vsub.s32 0, %v101
    %v103 = vrot.slane %v98, %v102
    %v105 = vmul.f32 %v94, %v103
    %v106 = vmul.f32 %v95, %v103
    %v107 = vmul.f32 %v96, %v103
    %v108 = vmul.f32 %v97, %v103
    %v109 = vld [vmem:[%s4] sm:$0xf]
    %v110 = vld [vmem:[%s4 + $0x4] sm:$0xf]
    %v111 = vld [vmem:[%s4 + $0x8] sm:$0xf]
    %v112 = vld [vmem:[%s4 + $0xc] sm:$0xf]
    %v113 = vunpack.c.l.bf16 %v109
    %v114 = vunpack.c.l.bf16 %v110
    %v115 = vunpack.c.l.bf16 %v111
    %v116 = vunpack.c.l.bf16 %v112
    %v117 = vld [vmem:[%s5] sm:$0xff]
    %v118 = vld [vmem:[%s5 + $0x8] sm:$0xff]
    %v119 = vld [vmem:[%s5 + $0x10] sm:$0xff]
    %v120 = vld [vmem:[%s5 + $0x18] sm:$0xff]
    %122 = vset.pattern.permute.xlu0 0
    %123 = vperm.xlu0 %122, %v117
    %v124 = vpop.permute.xlu0 %123
    %127 = vset.pattern.permute.xlu0 0
    %128 = vperm.xlu0 %127, %v118
    %v129 = vpop.permute.xlu0 %128
    %132 = vset.pattern.permute.xlu0 0
    %133 = vperm.xlu0 %132, %v119
    %v134 = vpop.permute.xlu0 %133
    %137 = vset.pattern.permute.xlu0 0
    %138 = vperm.xlu0 %137, %v120
    %v139 = vpop.permute.xlu0 %138
    %vm141 = vcmp.ge.f32.partialorder %v113, %v124
    %vm142 = vcmp.ge.f32.partialorder %v114, %v129
    %vm143 = vcmp.ge.f32.partialorder %v115, %v134
    %vm144 = vcmp.ge.f32.partialorder %v116, %v139
    %v145 = vsel %vm141, %v113, 0.0
    %v146 = vsel %vm142, %v114, 0.0
    %v147 = vsel %vm143, %v115, 0.0
    %v148 = vsel %vm144, %v116, 0.0
    %v149 = vld [vmem:[%s6] sm:$0xff]
    %v150 = vld [vmem:[%s6 + $0x8] sm:$0xff]
    %v151 = vld [vmem:[%s6 + $0x10] sm:$0xff]
    %v152 = vld [vmem:[%s6 + $0x18] sm:$0xff]
    %154 = vset.pattern.permute.xlu0 0
    %155 = vperm.xlu0 %154, %v149
    %v156 = vpop.permute.xlu0 %155
    %159 = vset.pattern.permute.xlu0 0
    %160 = vperm.xlu0 %159, %v150
    %v161 = vpop.permute.xlu0 %160
    %164 = vset.pattern.permute.xlu0 0
    %165 = vperm.xlu0 %164, %v151
    %v166 = vpop.permute.xlu0 %165
    %169 = vset.pattern.permute.xlu0 0
    %170 = vperm.xlu0 %169, %v152
    %v171 = vpop.permute.xlu0 %170
    %v173 = vmul.f32 %v145, %v156
    %v174 = vmul.f32 %v146, %v161
    %v175 = vmul.f32 %v147, %v166
    %v176 = vmul.f32 %v148, %v171
    %v177 = vld [vmem:[%s7] sm:$0x1]
    %v179 = vlaneseq
    %v180 = vshrl.u32 %v179, 7
    %v181 = vsub.s32 0, %v180
    %v182 = vrot.slane %v177, %v181
    %v184 = vmul.f32 %v173, %v182
    %v185 = vmul.f32 %v174, %v182
    %v186 = vmul.f32 %v175, %v182
    %v187 = vmul.f32 %v176, %v182
    %v188 = vmul.f32 %v105, 0.5
    %v189 = vmul.f32 %v106, 0.5
    %v190 = vmul.f32 %v107, 0.5
    %v191 = vmul.f32 %v108, 0.5
    %v192 = vmul.f32 %v184, 0.5
    %v193 = vmul.f32 %v185, 0.5
    %v194 = vmul.f32 %v186, 0.5
    %v195 = vmul.f32 %v187, 0.5
    %v196 = vadd.f32 %v188, %v192
    %v197 = vadd.f32 %v189, %v193
    %v198 = vadd.f32 %v190, %v194
    %v199 = vadd.f32 %v191, %v195
    %vm200 = vcmask 261120
    %201 = vst.msk [vmem:[#allocation2] sm:$0xff] %vm200, %v196
    %202 = vst.msk [vmem:[#allocation2 + $0x8] sm:$0xff] %vm200, %v197
    %203 = vst.msk [vmem:[#allocation2 + $0x10] sm:$0xff] %vm200, %v198
    %204 = vst.msk [vmem:[#allocation2 + $0x18] sm:$0xff] %vm200, %v199
    // Predicated region
    $region34: #{graph_conv_forward.21} parent=1 // pred_check
      _
    $region35: #{graph_conv_forward.21} parent=1 // pred_check_branch
      %206 = sbr.rel (0) target = $region37
    $region36: #{graph_conv_forward.21} parent=1 // pred_region
      %s208 = ssub.s32 512, 512
      %209 = vsyncadd [#allocation3], %s208
      %s210 = sshll.u32 [#allocation2], 4
      %s211 = int_to_ptr.vmem [resolvable:$true] %s210
      %216 = dma.vmem_to_hbm [thread:$0]  %s211, 512, %s8, [#allocation3], 128, 128, 8
    $region37: #{graph_conv_forward.21} parent=1 // pred_fallthru
      _
    // Predicated region
    $region38: #{graph_conv_forward.21} parent=1 // pred_check
      _
    $region39: #{graph_conv_forward.21} parent=1 // pred_check_branch
      %218 = sbr.rel (0) target = $region41
    $region40: #{graph_conv_forward.21} parent=1 // pred_region
      %219 = dma.done [#allocation3], 512
    $region41: #{graph_conv_forward.21} parent=1 // pred_fallthru
      _
    %220 = vsyncpa [#allocation3], 1

</llo_original>
